<compile_context>
chip_gen: v7x
topology: tpu7x:2x2x1
jax: 0.10.0
libtpu: 0.0.40
codegen_flags: <defaults>
</compile_context>

<pallas_src>
import jax
import jax.numpy as jnp
import numpy as np
from jax.experimental import pallas as pl
from jax.experimental.pallas import tpu as pltpu

HIDDEN = 32   # Hidden_Size
VOCAB = 16    # Input_Size
SEQ = 8       # number of tokens fed through the encoder (sequence length)
BATCH = 2     # independent sequences per fused call (parallel grid axis)


def _encoder_gru_seq_kernel(onehot_ref,   # (1, T, V)  one-hot token rows for this sequence
                            h0_ref,       # (1, 1, H)  initial hidden state for this sequence
                            gi_tbl_ref,   # (V, 3H)    embedding @ W_ih^T + b_ih (folded at init)
                            whh_t_ref,    # (H, 3H)    W_hh^T
                            bhh_ref,      # (1, 3H)    b_hh
                            out_ref):     # (1, 1, T*H) lane-dense per-step hidden slab
    T = onehot_ref.shape[1]
    H = whh_t_ref.shape[0]

    # ---- Hoisted gather + input projection: ONE (T,V)@(V,3H) MXU matmul. ----
    # gi_table already contains embedding @ W_ih^T + b_ih, so the one-hot
    # selection yields gi_t for every step off the serial chain.
    gi_all = jnp.dot(onehot_ref[0], gi_tbl_ref[...],
                     preferred_element_type=jnp.float32)              # (T, 3H)

    whh_t = whh_t_ref[...]
    bhh = bhh_ref[...]

    # ---- Serial GRU recurrence (only the h-dependent matmul remains). ----
    h = h0_ref[0].astype(jnp.float32)                                 # (1, H)
    outs = []
    for t in range(T):                       # small static trip count -> full unroll
        gi = gi_all[t:t + 1, :]                                       # (1, 3H), static slice
        gh = jnp.dot(h, whh_t, preferred_element_type=jnp.float32) + bhh

        # Fused r/z sigmoid: single EUP op over the first 2H lanes (gate order r|z|n).
        rz = jax.nn.sigmoid(gi[:, :2 * H] + gh[:, :2 * H])
        r = rz[:, :H]
        z = rz[:, H:]
        n = jnp.tanh(gi[:, 2 * H:] + r * gh[:, 2 * H:])
        h = (1.0 - z) * n + z * h
        outs.append(h)

    # Single lane-dense (1, T*H) store: no per-step narrow vst.msk writeback.
    out_ref[0] = jnp.concatenate(outs, axis=-1).astype(out_ref.dtype)


def encoder_rnn_sequence_batched(tokens_bt, hidden0_b, params):
    """Run B independent encoder sequences in one fused kernel.

    tokens_bt: (B, T) int32; hidden0_b: (B, 1, H).
    Returns (outputs (B, T, H), hidden (B, 1, H)); hidden is outputs[:, -1].
    """
    gi_tbl = params["gi_table"]               # (V, 3H)  folded at init
    whh_t = params["w_hh_t"]                  # (H, 3H)  pre-transposed at init
    bhh = params["b_hh"]                      # (1, 3H)
    V = gi_tbl.shape[0]
    H = whh_t.shape[0]
    B, T = int(tokens_bt.shape[0]), int(tokens_bt.shape[1])

    # One-hot gather rows built in the wrapper (also bounds-safe for bad tokens).
    onehot = jax.nn.one_hot(tokens_bt, V, dtype=jnp.float32)          # (B, T, V)
    h0 = hidden0_b.reshape(B, 1, H).astype(jnp.float32)

    shared = lambda b: (0, 0)                 # weights: same full block every program

    slab = pl.pallas_call(
        _encoder_gru_seq_kernel,
        out_shape=jax.ShapeDtypeStruct((B, 1, T * H), jnp.float32),
        grid_spec=pltpu.PrefetchScalarGridSpec(
            num_scalar_prefetch=0,
            grid=(B,),
            in_specs=[
                pl.BlockSpec((1, T, V), lambda b: (b, 0, 0)),         # per-seq one-hot tokens
                pl.BlockSpec((1, 1, H), lambda b: (b, 0, 0)),         # per-seq initial hidden
                pl.BlockSpec((V, 3 * H), shared),                     # gi_table (emb@W_ih^T+b_ih)
                pl.BlockSpec((H, 3 * H), shared),                     # W_hh^T
                pl.BlockSpec((1, 3 * H), shared),                     # b_hh
            ],
            out_specs=pl.BlockSpec((1, 1, T * H), lambda b: (b, 0, 0)),
        ),
        compiler_params=pltpu.CompilerParams(dimension_semantics=("parallel",)),
    )(onehot, h0, gi_tbl, whh_t, bhh)

    outputs = slab.reshape(B, T, H)
    hidden = outputs[:, -1, :].reshape(B, 1, H)   # final Hidden aliases the last output row
    return outputs, hidden


def encoder_rnn_sequence(tokens, hidden0, params):
    """Single-sequence encoder: tokens (T,) int32, hidden0 (1, 1, H).

    Returns (Outputs (T, 1, H), Hidden (1, 1, H)) — the B=1 case of the batched kernel.
    """
    T = int(tokens.shape[0])
    H = params["w_hh_t"].shape[0]
    outs_b, hid_b = encoder_rnn_sequence_batched(
        tokens.reshape(1, T).astype(jnp.int32), hidden0.reshape(1, 1, H), params)
    return outs_b.reshape(T, 1, H), hid_b.reshape(1, 1, H)


def encoder_rnn_forward(token, hidden, params):
    """Single-step forward with the original module's exact signature.

    token: (1,) int32; hidden: (1, 1, H). Returns (Output, Hidden), each (1, 1, H).
    """
    outputs, hidden_new = encoder_rnn_sequence(token.reshape(1), hidden, params)
    return outputs.reshape(1, 1, -1), hidden_new


def init_params(key, vocab, hidden):
    """Deterministic synthetic init mimicking PyTorch defaults.

    Weights are pre-transposed and the embedding + input projection + b_ih are
    folded into gi_table once, so no per-call transpose/reshape/projection work.
    """
    k_emb, k_wih, k_whh, k_bih, k_bhh = jax.random.split(key, 5)
    bound = 1.0 / np.sqrt(hidden)
    emb = jax.random.normal(k_emb, (vocab, hidden), jnp.float32)
    w_ih = jax.random.uniform(k_wih, (3 * hidden, hidden), jnp.float32, -bound, bound)
    w_hh = jax.random.uniform(k_whh, (3 * hidden, hidden), jnp.float32, -bound, bound)
    b_ih = jax.random.uniform(k_bih, (1, 3 * hidden), jnp.float32, -bound, bound)
    b_hh = jax.random.uniform(k_bhh, (1, 3 * hidden), jnp.float32, -bound, bound)
    w_ih_t = jnp.asarray(w_ih.T)                                     # (H, 3H)
    return {
        "embedding": emb,                                            # kept for the reference
        "w_ih_t": w_ih_t,
        "b_ih": b_ih,
        "gi_table": emb @ w_ih_t + b_ih,                             # (V, 3H) folded at init
        "w_hh_t": jnp.asarray(w_hh.T),                               # (H, 3H)
        "b_hh": b_hh,
    }


def encoder_rnn_reference(tokens, hidden0, params):
    """Pure-JAX reference: the PyTorch per-token forward iterated over tokens."""
    H = hidden0.shape[-1]
    h = hidden0.reshape(1, H)
    outs = []
    for t in range(int(tokens.shape[0])):
        x = params["embedding"][tokens[t]].reshape(1, H)
        gi = x @ params["w_ih_t"] + params["b_ih"]
        gh = h @ params["w_hh_t"] + params["b_hh"]
        i_r, i_z, i_n = gi[:, :H], gi[:, H:2 * H], gi[:, 2 * H:]
        h_r, h_z, h_n = gh[:, :H], gh[:, H:2 * H], gh[:, 2 * H:]
        r = jax.nn.sigmoid(i_r + h_r)
        z = jax.nn.sigmoid(i_z + h_z)
        n = jnp.tanh(i_n + r * h_n)
        h = (1.0 - z) * n + z * h
        outs.append(h)
    return jnp.stack(outs, 0).reshape(-1, 1, H), h.reshape(1, 1, H)


if __name__ == "__main__":
    key = jax.random.PRNGKey(0)
    params = init_params(key, VOCAB, HIDDEN)

    tokens_bt = jax.random.randint(jax.random.PRNGKey(1), (BATCH, SEQ), 0, VOCAB,
                                   dtype=jnp.int32)
    hidden0 = jnp.zeros((1, 1, HIDDEN), jnp.float32)        # initHidden()
    hidden0_b = jnp.zeros((BATCH, 1, HIDDEN), jnp.float32)

    # --- Batched fused encoder: B sequences, one pallas_call, parallel grid axis. ---
    outs_b, hid_b = encoder_rnn_sequence_batched(tokens_bt, hidden0_b, params)
    outs_b = jax.block_until_ready(outs_b)
    hid_b = jax.block_until_ready(hid_b)
    for b in range(BATCH):
        o_ref, h_ref = encoder_rnn_reference(tokens_bt[b], hidden0, params)
        np.testing.assert_allclose(np.asarray(outs_b[b]),
                                   np.asarray(o_ref.reshape(SEQ, HIDDEN)),
                                   rtol=1e-5, atol=1e-5)
        np.testing.assert_allclose(np.asarray(hid_b[b]),
                                   np.asarray(h_ref.reshape(1, HIDDEN)),
                                   rtol=1e-5, atol=1e-5)
    assert outs_b.shape == (BATCH, SEQ, HIDDEN) and hid_b.shape == (BATCH, 1, HIDDEN)

    # --- Single-sequence encoder (matches original per-call semantics). ---
    tokens = tokens_bt[0]
    outputs, hidden = encoder_rnn_sequence(tokens, hidden0, params)
    outputs = jax.block_until_ready(outputs)
    hidden = jax.block_until_ready(hidden)
    out_ref, h_ref = encoder_rnn_reference(tokens, hidden0, params)
    np.testing.assert_allclose(np.asarray(outputs), np.asarray(out_ref), rtol=1e-5, atol=1e-5)
    np.testing.assert_allclose(np.asarray(hidden), np.asarray(h_ref), rtol=1e-5, atol=1e-5)
    assert outputs.shape == (SEQ, 1, HIDDEN) and hidden.shape == (1, 1, HIDDEN)

    # --- Single-step forward (the original module's signature) — T=1 case. ---
    out1, h1 = encoder_rnn_forward(tokens[:1], hidden0, params)
    out1 = jax.block_until_ready(out1)
    h1 = jax.block_until_ready(h1)
    o_ref1, h_ref1 = encoder_rnn_reference(tokens[:1], hidden0, params)
    np.testing.assert_allclose(np.asarray(out1), np.asarray(o_ref1), rtol=1e-5, atol=1e-5)
    np.testing.assert_allclose(np.asarray(h1), np.asarray(h_ref1), rtol=1e-5, atol=1e-5)
    assert out1.shape == (1, 1, HIDDEN) and h1.shape == (1, 1, HIDDEN)

    print("KERNEL_OK")
</pallas_src>

<mosaic_0001>
module attributes {stable_mosaic.version = 11 : i64} {
  func.func @_encoder_gru_seq_kernel(%arg0: i32, %arg1: memref<1x8x16xf32, #tpu.memory_space<vmem>>, %arg2: memref<1x1x32xf32, #tpu.memory_space<vmem>>, %arg3: memref<16x96xf32, #tpu.memory_space<vmem>>, %arg4: memref<32x96xf32, #tpu.memory_space<vmem>>, %arg5: memref<1x96xf32, #tpu.memory_space<vmem>>, %arg6: memref<1x1x256xf32, #tpu.memory_space<vmem>>) attributes {dimension_semantics = [#tpu.dimension_semantics<parallel>], iteration_bounds = array<i64: 2>, scalar_prefetch = 0 : i64, scratch_operands = 0 : i64, tpu.core_type = #tpu.core_type<tc>, window_params = [{transform_indices = @transform_0, window_bounds = array<i64: 1, 8, 16>}, {transform_indices = @transform_1, window_bounds = array<i64: 1, 1, 32>}, {pipeline_mode = #tpu.pipeline_mode<synchronous>, transform_indices = @transform_2, window_bounds = array<i64: 16, 96>}, {pipeline_mode = #tpu.pipeline_mode<synchronous>, transform_indices = @transform_3, window_bounds = array<i64: 32, 96>}, {pipeline_mode = #tpu.pipeline_mode<synchronous>, transform_indices = @transform_4, window_bounds = array<i64: 1, 96>}, {transform_indices = @transform_5, window_bounds = array<i64: 1, 1, 256>}]} {
    %c0 = arith.constant 0 : index
    %c0_0 = arith.constant 0 : index
    %c0_1 = arith.constant 0 : index
    %0 = vector.load %arg1[%c0, %c0_0, %c0_1] : memref<1x8x16xf32, #tpu.memory_space<vmem>>, vector<1x8x16xf32>
    %1 = vector.shape_cast %0 : vector<1x8x16xf32> to vector<8x16xf32>
    %c0_2 = arith.constant 0 : index
    %c0_3 = arith.constant 0 : index
    %2 = vector.load %arg3[%c0_2, %c0_3] : memref<16x96xf32, #tpu.memory_space<vmem>>, vector<16x96xf32>
    %cst = arith.constant dense<0.000000e+00> : vector<8x96xf32>
    %3 = tpu.matmul %1, %2, %cst {dimension_numbers = #tpu.dot_dimension_numbers<[1], [0], [0], [1], [0, 0, 1, 1], [], []>} : vector<8x16xf32>, vector<16x96xf32>, vector<8x96xf32> -> vector<8x96xf32>
    %c0_4 = arith.constant 0 : index
    %c0_5 = arith.constant 0 : index
    %4 = vector.load %arg4[%c0_4, %c0_5] : memref<32x96xf32, #tpu.memory_space<vmem>>, vector<32x96xf32>
    %c0_6 = arith.constant 0 : index
    %c0_7 = arith.constant 0 : index
    %5 = vector.load %arg5[%c0_6, %c0_7] : memref<1x96xf32, #tpu.memory_space<vmem>>, vector<1x96xf32>
    %c0_8 = arith.constant 0 : index
    %c0_9 = arith.constant 0 : index
    %c0_10 = arith.constant 0 : index
    %6 = vector.load %arg2[%c0_8, %c0_9, %c0_10] : memref<1x1x32xf32, #tpu.memory_space<vmem>>, vector<1x1x32xf32>
    %7 = vector.shape_cast %6 : vector<1x1x32xf32> to vector<1x32xf32>
    %8 = vector.extract_strided_slice %3 {offsets = [0, 0], sizes = [1, 96], strides = [1, 1]} : vector<8x96xf32> to vector<1x96xf32>
    %cst_11 = arith.constant dense<0.000000e+00> : vector<1x96xf32>
    %9 = tpu.matmul %7, %4, %cst_11 {dimension_numbers = #tpu.dot_dimension_numbers<[1], [0], [0], [1], [0, 0, 1, 1], [], []>} : vector<1x32xf32>, vector<32x96xf32>, vector<1x96xf32> -> vector<1x96xf32>
    %10 = arith.addf %9, %5 : vector<1x96xf32>
    %11 = vector.extract_strided_slice %8 {offsets = [0, 0], sizes = [1, 64], strides = [1, 1]} : vector<1x96xf32> to vector<1x64xf32>
    %12 = vector.extract_strided_slice %10 {offsets = [0, 0], sizes = [1, 64], strides = [1, 1]} : vector<1x96xf32> to vector<1x64xf32>
    %13 = arith.addf %11, %12 : vector<1x64xf32>
    %14 = arith.negf %13 : vector<1x64xf32>
    %15 = math.exp %14 : vector<1x64xf32>
    %cst_12 = arith.constant 1.000000e+00 : f32
    %16 = vector.broadcast %cst_12 : f32 to vector<1x64xf32>
    %17 = arith.addf %16, %15 : vector<1x64xf32>
    %18 = arith.divf %16, %17 : vector<1x64xf32>
    %19 = vector.extract_strided_slice %18 {offsets = [0, 0], sizes = [1, 32], strides = [1, 1]} : vector<1x64xf32> to vector<1x32xf32>
    %20 = vector.extract_strided_slice %18 {offsets = [0, 32], sizes = [1, 32], strides = [1, 1]} : vector<1x64xf32> to vector<1x32xf32>
    %21 = vector.extract_strided_slice %8 {offsets = [0, 64], sizes = [1, 32], strides = [1, 1]} : vector<1x96xf32> to vector<1x32xf32>
    %22 = vector.extract_strided_slice %10 {offsets = [0, 64], sizes = [1, 32], strides = [1, 1]} : vector<1x96xf32> to vector<1x32xf32>
    %23 = arith.mulf %19, %22 : vector<1x32xf32>
    %24 = arith.addf %21, %23 : vector<1x32xf32>
    %25 = math.tanh %24 : vector<1x32xf32>
    %cst_13 = arith.constant 1.000000e+00 : f32
    %26 = vector.broadcast %cst_13 : f32 to vector<1x32xf32>
    %27 = arith.subf %26, %20 : vector<1x32xf32>
    %28 = arith.mulf %27, %25 : vector<1x32xf32>
    %29 = arith.mulf %20, %7 : vector<1x32xf32>
    %30 = arith.addf %28, %29 : vector<1x32xf32>
    %31 = vector.extract_strided_slice %3 {offsets = [1, 0], sizes = [1, 96], strides = [1, 1]} : vector<8x96xf32> to vector<1x96xf32>
    %cst_14 = arith.constant dense<0.000000e+00> : vector<1x96xf32>
    %32 = tpu.matmul %30, %4, %cst_14 {dimension_numbers = #tpu.dot_dimension_numbers<[1], [0], [0], [1], [0, 0, 1, 1], [], []>} : vector<1x32xf32>, vector<32x96xf32>, vector<1x96xf32> -> vector<1x96xf32>
    %33 = arith.addf %32, %5 : vector<1x96xf32>
    %34 = vector.extract_strided_slice %31 {offsets = [0, 0], sizes = [1, 64], strides = [1, 1]} : vector<1x96xf32> to vector<1x64xf32>
    %35 = vector.extract_strided_slice %33 {offsets = [0, 0], sizes = [1, 64], strides = [1, 1]} : vector<1x96xf32> to vector<1x64xf32>
    %36 = arith.addf %34, %35 : vector<1x64xf32>
    %37 = arith.negf %36 : vector<1x64xf32>
    %38 = math.exp %37 : vector<1x64xf32>
    %cst_15 = arith.constant 1.000000e+00 : f32
    %39 = vector.broadcast %cst_15 : f32 to vector<1x64xf32>
    %40 = arith.addf %39, %38 : vector<1x64xf32>
    %41 = arith.divf %39, %40 : vector<1x64xf32>
    %42 = vector.extract_strided_slice %41 {offsets = [0, 0], sizes = [1, 32], strides = [1, 1]} : vector<1x64xf32> to vector<1x32xf32>
    %43 = vector.extract_strided_slice %41 {offsets = [0, 32], sizes = [1, 32], strides = [1, 1]} : vector<1x64xf32> to vector<1x32xf32>
    %44 = vector.extract_strided_slice %31 {offsets = [0, 64], sizes = [1, 32], strides = [1, 1]} : vector<1x96xf32> to vector<1x32xf32>
    %45 = vector.extract_strided_slice %33 {offsets = [0, 64], sizes = [1, 32], strides = [1, 1]} : vector<1x96xf32> to vector<1x32xf32>
    %46 = arith.mulf %42, %45 : vector<1x32xf32>
    %47 = arith.addf %44, %46 : vector<1x32xf32>
    %48 = math.tanh %47 : vector<1x32xf32>
    %cst_16 = arith.constant 1.000000e+00 : f32
    %49 = vector.broadcast %cst_16 : f32 to vector<1x32xf32>
    %50 = arith.subf %49, %43 : vector<1x32xf32>
    %51 = arith.mulf %50, %48 : vector<1x32xf32>
    %52 = arith.mulf %43, %30 : vector<1x32xf32>
    %53 = arith.addf %51, %52 : vector<1x32xf32>
    %54 = vector.extract_strided_slice %3 {offsets = [2, 0], sizes = [1, 96], strides = [1, 1]} : vector<8x96xf32> to vector<1x96xf32>
    %cst_17 = arith.constant dense<0.000000e+00> : vector<1x96xf32>
    %55 = tpu.matmul %53, %4, %cst_17 {dimension_numbers = #tpu.dot_dimension_numbers<[1], [0], [0], [1], [0, 0, 1, 1], [], []>} : vector<1x32xf32>, vector<32x96xf32>, vector<1x96xf32> -> vector<1x96xf32>
    %56 = arith.addf %55, %5 : vector<1x96xf32>
    %57 = vector.extract_strided_slice %54 {offsets = [0, 0], sizes = [1, 64], strides = [1, 1]} : vector<1x96xf32> to vector<1x64xf32>
    %58 = vector.extract_strided_slice %56 {offsets = [0, 0], sizes = [1, 64], strides = [1, 1]} : vector<1x96xf32> to vector<1x64xf32>
    %59 = arith.addf %57, %58 : vector<1x64xf32>
    %60 = arith.negf %59 : vector<1x64xf32>
    %61 = math.exp %60 : vector<1x64xf32>
    %cst_18 = arith.constant 1.000000e+00 : f32
    %62 = vector.broadcast %cst_18 : f32 to vector<1x64xf32>
    %63 = arith.addf %62, %61 : vector<1x64xf32>
    %64 = arith.divf %62, %63 : vector<1x64xf32>
    %65 = vector.extract_strided_slice %64 {offsets = [0, 0], sizes = [1, 32], strides = [1, 1]} : vector<1x64xf32> to vector<1x32xf32>
    %66 = vector.extract_strided_slice %64 {offsets = [0, 32], sizes = [1, 32], strides = [1, 1]} : vector<1x64xf32> to vector<1x32xf32>
    %67 = vector.extract_strided_slice %54 {offsets = [0, 64], sizes = [1, 32], strides = [1, 1]} : vector<1x96xf32> to vector<1x32xf32>
    %68 = vector.extract_strided_slice %56 {offsets = [0, 64], sizes = [1, 32], strides = [1, 1]} : vector<1x96xf32> to vector<1x32xf32>
    %69 = arith.mulf %65, %68 : vector<1x32xf32>
    %70 = arith.addf %67, %69 : vector<1x32xf32>
    %71 = math.tanh %70 : vector<1x32xf32>
    %cst_19 = arith.constant 1.000000e+00 : f32
    %72 = vector.broadcast %cst_19 : f32 to vector<1x32xf32>
    %73 = arith.subf %72, %66 : vector<1x32xf32>
    %74 = arith.mulf %73, %71 : vector<1x32xf32>
    %75 = arith.mulf %66, %53 : vector<1x32xf32>
    %76 = arith.addf %74, %75 : vector<1x32xf32>
    %77 = vector.extract_strided_slice %3 {offsets = [3, 0], sizes = [1, 96], strides = [1, 1]} : vector<8x96xf32> to vector<1x96xf32>
    %cst_20 = arith.constant dense<0.000000e+00> : vector<1x96xf32>
    %78 = tpu.matmul %76, %4, %cst_20 {dimension_numbers = #tpu.dot_dimension_numbers<[1], [0], [0], [1], [0, 0, 1, 1], [], []>} : vector<1x32xf32>, vector<32x96xf32>, vector<1x96xf32> -> vector<1x96xf32>
    %79 = arith.addf %78, %5 : vector<1x96xf32>
    %80 = vector.extract_strided_slice %77 {offsets = [0, 0], sizes = [1, 64], strides = [1, 1]} : vector<1x96xf32> to vector<1x64xf32>
    %81 = vector.extract_strided_slice %79 {offsets = [0, 0], sizes = [1, 64], strides = [1, 1]} : vector<1x96xf32> to vector<1x64xf32>
    %82 = arith.addf %80, %81 : vector<1x64xf32>
    %83 = arith.negf %82 : vector<1x64xf32>
    %84 = math.exp %83 : vector<1x64xf32>
    %cst_21 = arith.constant 1.000000e+00 : f32
    %85 = vector.broadcast %cst_21 : f32 to vector<1x64xf32>
    %86 = arith.addf %85, %84 : vector<1x64xf32>
    %87 = arith.divf %85, %86 : vector<1x64xf32>
    %88 = vector.extract_strided_slice %87 {offsets = [0, 0], sizes = [1, 32], strides = [1, 1]} : vector<1x64xf32> to vector<1x32xf32>
    %89 = vector.extract_strided_slice %87 {offsets = [0, 32], sizes = [1, 32], strides = [1, 1]} : vector<1x64xf32> to vector<1x32xf32>
    %90 = vector.extract_strided_slice %77 {offsets = [0, 64], sizes = [1, 32], strides = [1, 1]} : vector<1x96xf32> to vector<1x32xf32>
    %91 = vector.extract_strided_slice %79 {offsets = [0, 64], sizes = [1, 32], strides = [1, 1]} : vector<1x96xf32> to vector<1x32xf32>
    %92 = arith.mulf %88, %91 : vector<1x32xf32>
    %93 = arith.addf %90, %92 : vector<1x32xf32>
    %94 = math.tanh %93 : vector<1x32xf32>
    %cst_22 = arith.constant 1.000000e+00 : f32
    %95 = vector.broadcast %cst_22 : f32 to vector<1x32xf32>
    %96 = arith.subf %95, %89 : vector<1x32xf32>
    %97 = arith.mulf %96, %94 : vector<1x32xf32>
    %98 = arith.mulf %89, %76 : vector<1x32xf32>
    %99 = arith.addf %97, %98 : vector<1x32xf32>
    %100 = vector.extract_strided_slice %3 {offsets = [4, 0], sizes = [1, 96], strides = [1, 1]} : vector<8x96xf32> to vector<1x96xf32>
    %cst_23 = arith.constant dense<0.000000e+00> : vector<1x96xf32>
    %101 = tpu.matmul %99, %4, %cst_23 {dimension_numbers = #tpu.dot_dimension_numbers<[1], [0], [0], [1], [0, 0, 1, 1], [], []>} : vector<1x32xf32>, vector<32x96xf32>, vector<1x96xf32> -> vector<1x96xf32>
    %102 = arith.addf %101, %5 : vector<1x96xf32>
    %103 = vector.extract_strided_slice %100 {offsets = [0, 0], sizes = [1, 64], strides = [1, 1]} : vector<1x96xf32> to vector<1x64xf32>
    %104 = vector.extract_strided_slice %102 {offsets = [0, 0], sizes = [1, 64], strides = [1, 1]} : vector<1x96xf32> to vector<1x64xf32>
    %105 = arith.addf %103, %104 : vector<1x64xf32>
    %106 = arith.negf %105 : vector<1x64xf32>
    %107 = math.exp %106 : vector<1x64xf32>
    %cst_24 = arith.constant 1.000000e+00 : f32
    %108 = vector.broadcast %cst_24 : f32 to vector<1x64xf32>
    %109 = arith.addf %108, %107 : vector<1x64xf32>
    %110 = arith.divf %108, %109 : vector<1x64xf32>
    %111 = vector.extract_strided_slice %110 {offsets = [0, 0], sizes = [1, 32], strides = [1, 1]} : vector<1x64xf32> to vector<1x32xf32>
    %112 = vector.extract_strided_slice %110 {offsets = [0, 32], sizes = [1, 32], strides = [1, 1]} : vector<1x64xf32> to vector<1x32xf32>
    %113 = vector.extract_strided_slice %100 {offsets = [0, 64], sizes = [1, 32], strides = [1, 1]} : vector<1x96xf32> to vector<1x32xf32>
    %114 = vector.extract_strided_slice %102 {offsets = [0, 64], sizes = [1, 32], strides = [1, 1]} : vector<1x96xf32> to vector<1x32xf32>
    %115 = arith.mulf %111, %114 : vector<1x32xf32>
    %116 = arith.addf %113, %115 : vector<1x32xf32>
    %117 = math.tanh %116 : vector<1x32xf32>
    %cst_25 = arith.constant 1.000000e+00 : f32
    %118 = vector.broadcast %cst_25 : f32 to vector<1x32xf32>
    %119 = arith.subf %118, %112 : vector<1x32xf32>
    %120 = arith.mulf %119, %117 : vector<1x32xf32>
    %121 = arith.mulf %112, %99 : vector<1x32xf32>
    %122 = arith.addf %120, %121 : vector<1x32xf32>
    %123 = vector.extract_strided_slice %3 {offsets = [5, 0], sizes = [1, 96], strides = [1, 1]} : vector<8x96xf32> to vector<1x96xf32>
    %cst_26 = arith.constant dense<0.000000e+00> : vector<1x96xf32>
    %124 = tpu.matmul %122, %4, %cst_26 {dimension_numbers = #tpu.dot_dimension_numbers<[1], [0], [0], [1], [0, 0, 1, 1], [], []>} : vector<1x32xf32>, vector<32x96xf32>, vector<1x96xf32> -> vector<1x96xf32>
    %125 = arith.addf %124, %5 : vector<1x96xf32>
    %126 = vector.extract_strided_slice %123 {offsets = [0, 0], sizes = [1, 64], strides = [1, 1]} : vector<1x96xf32> to vector<1x64xf32>
    %127 = vector.extract_strided_slice %125 {offsets = [0, 0], sizes = [1, 64], strides = [1, 1]} : vector<1x96xf32> to vector<1x64xf32>
    %128 = arith.addf %126, %127 : vector<1x64xf32>
    %129 = arith.negf %128 : vector<1x64xf32>
    %130 = math.exp %129 : vector<1x64xf32>
    %cst_27 = arith.constant 1.000000e+00 : f32
    %131 = vector.broadcast %cst_27 : f32 to vector<1x64xf32>
    %132 = arith.addf %131, %130 : vector<1x64xf32>
    %133 = arith.divf %131, %132 : vector<1x64xf32>
    %134 = vector.extract_strided_slice %133 {offsets = [0, 0], sizes = [1, 32], strides = [1, 1]} : vector<1x64xf32> to vector<1x32xf32>
    %135 = vector.extract_strided_slice %133 {offsets = [0, 32], sizes = [1, 32], strides = [1, 1]} : vector<1x64xf32> to vector<1x32xf32>
    %136 = vector.extract_strided_slice %123 {offsets = [0, 64], sizes = [1, 32], strides = [1, 1]} : vector<1x96xf32> to vector<1x32xf32>
    %137 = vector.extract_strided_slice %125 {offsets = [0, 64], sizes = [1, 32], strides = [1, 1]} : vector<1x96xf32> to vector<1x32xf32>
    %138 = arith.mulf %134, %137 : vector<1x32xf32>
    %139 = arith.addf %136, %138 : vector<1x32xf32>
    %140 = math.tanh %139 : vector<1x32xf32>
    %cst_28 = arith.constant 1.000000e+00 : f32
    %141 = vector.broadcast %cst_28 : f32 to vector<1x32xf32>
    %142 = arith.subf %141, %135 : vector<1x32xf32>
    %143 = arith.mulf %142, %140 : vector<1x32xf32>
    %144 = arith.mulf %135, %122 : vector<1x32xf32>
    %145 = arith.addf %143, %144 : vector<1x32xf32>
    %146 = vector.extract_strided_slice %3 {offsets = [6, 0], sizes = [1, 96], strides = [1, 1]} : vector<8x96xf32> to vector<1x96xf32>
    %cst_29 = arith.constant dense<0.000000e+00> : vector<1x96xf32>
    %147 = tpu.matmul %145, %4, %cst_29 {dimension_numbers = #tpu.dot_dimension_numbers<[1], [0], [0], [1], [0, 0, 1, 1], [], []>} : vector<1x32xf32>, vector<32x96xf32>, vector<1x96xf32> -> vector<1x96xf32>
    %148 = arith.addf %147, %5 : vector<1x96xf32>
    %149 = vector.extract_strided_slice %146 {offsets = [0, 0], sizes = [1, 64], strides = [1, 1]} : vector<1x96xf32> to vector<1x64xf32>
    %150 = vector.extract_strided_slice %148 {offsets = [0, 0], sizes = [1, 64], strides = [1, 1]} : vector<1x96xf32> to vector<1x64xf32>
    %151 = arith.addf %149, %150 : vector<1x64xf32>
    %152 = arith.negf %151 : vector<1x64xf32>
    %153 = math.exp %152 : vector<1x64xf32>
    %cst_30 = arith.constant 1.000000e+00 : f32
    %154 = vector.broadcast %cst_30 : f32 to vector<1x64xf32>
    %155 = arith.addf %154, %153 : vector<1x64xf32>
    %156 = arith.divf %154, %155 : vector<1x64xf32>
    %157 = vector.extract_strided_slice %156 {offsets = [0, 0], sizes = [1, 32], strides = [1, 1]} : vector<1x64xf32> to vector<1x32xf32>
    %158 = vector.extract_strided_slice %156 {offsets = [0, 32], sizes = [1, 32], strides = [1, 1]} : vector<1x64xf32> to vector<1x32xf32>
    %159 = vector.extract_strided_slice %146 {offsets = [0, 64], sizes = [1, 32], strides = [1, 1]} : vector<1x96xf32> to vector<1x32xf32>
    %160 = vector.extract_strided_slice %148 {offsets = [0, 64], sizes = [1, 32], strides = [1, 1]} : vector<1x96xf32> to vector<1x32xf32>
    %161 = arith.mulf %157, %160 : vector<1x32xf32>
    %162 = arith.addf %159, %161 : vector<1x32xf32>
    %163 = math.tanh %162 : vector<1x32xf32>
    %cst_31 = arith.constant 1.000000e+00 : f32
    %164 = vector.broadcast %cst_31 : f32 to vector<1x32xf32>
    %165 = arith.subf %164, %158 : vector<1x32xf32>
    %166 = arith.mulf %165, %163 : vector<1x32xf32>
    %167 = arith.mulf %158, %145 : vector<1x32xf32>
    %168 = arith.addf %166, %167 : vector<1x32xf32>
    %169 = vector.extract_strided_slice %3 {offsets = [7, 0], sizes = [1, 96], strides = [1, 1]} : vector<8x96xf32> to vector<1x96xf32>
    %cst_32 = arith.constant dense<0.000000e+00> : vector<1x96xf32>
    %170 = tpu.matmul %168, %4, %cst_32 {dimension_numbers = #tpu.dot_dimension_numbers<[1], [0], [0], [1], [0, 0, 1, 1], [], []>} : vector<1x32xf32>, vector<32x96xf32>, vector<1x96xf32> -> vector<1x96xf32>
    %171 = arith.addf %170, %5 : vector<1x96xf32>
    %172 = vector.extract_strided_slice %169 {offsets = [0, 0], sizes = [1, 64], strides = [1, 1]} : vector<1x96xf32> to vector<1x64xf32>
    %173 = vector.extract_strided_slice %171 {offsets = [0, 0], sizes = [1, 64], strides = [1, 1]} : vector<1x96xf32> to vector<1x64xf32>
    %174 = arith.addf %172, %173 : vector<1x64xf32>
    %175 = arith.negf %174 : vector<1x64xf32>
    %176 = math.exp %175 : vector<1x64xf32>
    %cst_33 = arith.constant 1.000000e+00 : f32
    %177 = vector.broadcast %cst_33 : f32 to vector<1x64xf32>
    %178 = arith.addf %177, %176 : vector<1x64xf32>
    %179 = arith.divf %177, %178 : vector<1x64xf32>
    %180 = vector.extract_strided_slice %179 {offsets = [0, 0], sizes = [1, 32], strides = [1, 1]} : vector<1x64xf32> to vector<1x32xf32>
    %181 = vector.extract_strided_slice %179 {offsets = [0, 32], sizes = [1, 32], strides = [1, 1]} : vector<1x64xf32> to vector<1x32xf32>
    %182 = vector.extract_strided_slice %169 {offsets = [0, 64], sizes = [1, 32], strides = [1, 1]} : vector<1x96xf32> to vector<1x32xf32>
    %183 = vector.extract_strided_slice %171 {offsets = [0, 64], sizes = [1, 32], strides = [1, 1]} : vector<1x96xf32> to vector<1x32xf32>
    %184 = arith.mulf %180, %183 : vector<1x32xf32>
    %185 = arith.addf %182, %184 : vector<1x32xf32>
    %186 = math.tanh %185 : vector<1x32xf32>
    %cst_34 = arith.constant 1.000000e+00 : f32
    %187 = vector.broadcast %cst_34 : f32 to vector<1x32xf32>
    %188 = arith.subf %187, %181 : vector<1x32xf32>
    %189 = arith.mulf %188, %186 : vector<1x32xf32>
    %190 = arith.mulf %181, %168 : vector<1x32xf32>
    %191 = arith.addf %189, %190 : vector<1x32xf32>
    %192 = tpu.concatenate %30, %53, %76, %99, %122, %145, %168, %191 in 1 : vector<1x32xf32>, vector<1x32xf32>, vector<1x32xf32>, vector<1x32xf32>, vector<1x32xf32>, vector<1x32xf32>, vector<1x32xf32>, vector<1x32xf32> -> vector<1x256xf32>
    %c0_35 = arith.constant 0 : index
    %c0_36 = arith.constant 0 : index
    %c0_37 = arith.constant 0 : index
    %193 = vector.load %arg6[%c0_35, %c0_36, %c0_37] : memref<1x1x256xf32, #tpu.memory_space<vmem>>, vector<1x1x256xf32>
    %194 = vector.shape_cast %193 : vector<1x1x256xf32> to vector<1x256xf32>
    %195 = vector.shape_cast %192 : vector<1x256xf32> to vector<1x1x256xf32>
    tpu.vector_store %arg6[%c0_35, %c0_36, %c0_37], %195 {strides = array<i32>} : memref<1x1x256xf32, #tpu.memory_space<vmem>>, vector<1x1x256xf32>,
    return
  }
  func.func @transform_0(%arg0: i32) -> (i32, i32, i32) {
    %c0_i32 = arith.constant 0 : i32
    %c0_i32_0 = arith.constant 0 : i32
    %c0_i32_1 = arith.constant 0 : i32
    return %arg0, %c0_i32, %c0_i32_0 : i32, i32, i32
  }
  func.func @transform_1(%arg0: i32) -> (i32, i32, i32) {
    %c0_i32 = arith.constant 0 : i32
    %c0_i32_0 = arith.constant 0 : i32
    %c0_i32_1 = arith.constant 0 : i32
    return %arg0, %c0_i32, %c0_i32_0 : i32, i32, i32
  }
  func.func @transform_2(%arg0: i32) -> (i32, i32) {
    %c0_i32 = arith.constant 0 : i32
    %c0_i32_0 = arith.constant 0 : i32
    %c0_i32_1 = arith.constant 0 : i32
    return %c0_i32, %c0_i32_0 : i32, i32
  }
  func.func @transform_3(%arg0: i32) -> (i32, i32) {
    %c0_i32 = arith.constant 0 : i32
    %c0_i32_0 = arith.constant 0 : i32
    %c0_i32_1 = arith.constant 0 : i32
    return %c0_i32, %c0_i32_0 : i32, i32
  }
  func.func @transform_4(%arg0: i32) -> (i32, i32) {
    %c0_i32 = arith.constant 0 : i32
    %c0_i32_0 = arith.constant 0 : i32
    %c0_i32_1 = arith.constant 0 : i32
    return %c0_i32, %c0_i32_0 : i32, i32
  }
  func.func @transform_5(%arg0: i32) -> (i32, i32, i32) {
    %c0_i32 = arith.constant 0 : i32
    %c0_i32_0 = arith.constant 0 : i32
    %c0_i32_1 = arith.constant 0 : i32
    return %arg0, %c0_i32, %c0_i32_0 : i32, i32, i32
  }
}

</mosaic_0001>

<llo_original>
// kernel: tpu_custom_call.1
$region0: #{tpu_custom_call.1}
  #allocation0 [shape = 'u32[]', space=smem, size = 0x4, offset = 0x4, fixed_abs, tag = 'smem constant byte address 0x4 - core index']
  #allocation1 [shape = 'u32[144,128]{1,0:T(1,128)}', space=vmem, size = 0x12000, scoped, tag = 'internal scratch']
  %s0 = inlined_call_operand.hbm [shape: f32[2,8,16], index: 0, kind: input, shape index: {}]
  %s1 = inlined_call_operand.vmem [shape: f32[2,1,32], index: 1, kind: input, shape index: {}]
  %s2 = inlined_call_operand.hbm [shape: f32[16,96], index: 2, kind: input, shape index: {}]
  %s3 = inlined_call_operand.hbm [shape: f32[32,96], index: 3, kind: input, shape index: {}]
  %s4 = inlined_call_operand.vmem [shape: f32[1,96], index: 4, kind: input, shape index: {}]
  %s5 = inlined_call_operand.hbm [shape: f32[2,1,256], index: 5, kind: output, shape index: {}]
  %s6 = sld [smem:[#allocation0]]
  $region65: #{tpu_custom_call.1} parent=0
    _
  %s8 = ssub.s32 1, %s6
  %s9 = scalar_select 0, %s8, %s6
  $region1: #{tpu_custom_call.1} parent=0
    #allocation2 [shape = 'u8[8192]{0}', space=vmem, size = 0x2000, scoped, tag = 'input window, operand 0']
    #allocation3 [shape = 's32[2]{0}', space=sflag, size = 0x8, scoped, tag = 'scoped memory for tpu_custom_call.1']
    #allocation4 [shape = 's32[2]{0}', space=sflag, size = 0x8, scoped, tag = 'scoped memory for tpu_custom_call.1']
    #allocation5 [shape = 'u8[8192]{0}', space=vmem, size = 0x2000, scoped, tag = 'input window, operand 2, single buffered']
    #allocation6 [shape = 's32[1]{0}', space=sflag, size = 0x4, scoped, tag = 'scoped memory for tpu_custom_call.1']
    #allocation7 [shape = 'u8[16384]{0}', space=vmem, size = 0x4000, scoped, tag = 'input window, operand 3, single buffered']
    #allocation8 [shape = 'u8[2048]{0}', space=vmem, size = 0x800, scoped, tag = 'output window, operand 0']
    %10 = vsyncpa [#allocation3], 0
    %s11 = scalar_lea.sflag [#allocation3], 1
    %12 = vsyncpa %s11, 0
    %13 = vsyncpa [#allocation6], 0
    %14 = vsyncpa [#allocation4], 0
    %s15 = scalar_lea.sflag [#allocation4], 1
    %16 = vsyncpa %s15, 0
    loop: start=0, step=1, limit=4
    $region2: #{tpu_custom_call.1} parent=1 // loop_pre_header
      _
    $region3: #{tpu_custom_call.1} parent=1 // loop_header
      %s18 = sphi 0, %s22
      %p19 = scmp.ge.s32.totalorder %s18, 4
      %s28 = sphi 0, %s30
      %s31 = sphi 0, %s28
      %s32 = sphi 0, %s31
      %s48 = sphi 0, %s32
      %s54 = sphi 0, %s56
      %s57 = sphi 0, %s54
      %s58 = sphi 0, %s57
      %s74 = sphi 0, %s58
      %s78 = sphi 0, %s78
      %s80 = sphi 0, %s78
      %s81 = sphi 0, %s80
      %s95 = sphi 0, %s81
      %s99 = sphi 0, %s99
      %s101 = sphi 0, %s99
      %s102 = sphi 0, %s101
      %s116 = sphi 0, %s102
      %s120 = sphi 0, %s120
      %s122 = sphi 0, %s120
      %s123 = sphi 0, %s122
      %s137 = sphi 0, %s123
      %s143 = sphi 0, %s145
      %s146 = sphi 0, %s143
      %s147 = sphi 0, %s146
      %s163 = sphi 0, %s147
    $region4: #{tpu_custom_call.1} parent=1 // loop_header_branch
      %21 = sbr.rel (%p19) target = $region8
    $region5: #{tpu_custom_call.1} parent=1 // loop_body
      %s23 = ssub.s32 %s18, 1
      %s24 = ssub.s32 %s18, 2
      %s25 = sadd.s32 %s18, 1
      %s26 = ssub.s32 %s18, %s25
      %p27 = scmp.eq.s32.totalorder %s26, 0
      %s29 = sadd.s32 %s28, 1
      %s30 = scalar_select %p27, %s28, %s29
      %p33 = pneg %p27
      %p34 = scmp.eq.s32.totalorder %s18, 1
      %p35 = por %p33, %p34
      %p36 = scmp.ne.s32.totalorder %s28, %s31
      %p37 = scmp.eq.s32.totalorder %s18, 0
      %p38 = por %p36, %p37
      %p39 = scmp.ne.s32.totalorder %s28, %s31
      %p40 = scmp.eq.s32.totalorder %s23, 1
      %p41 = por %p39, %p40
      %p42 = scmp.ne.s32.totalorder %s31, %s32
      %p43 = scmp.eq.s32.totalorder %s23, 0
      %p44 = por %p42, %p43
      %p45 = scmp.ne.s32.totalorder %s31, %s32
      %p46 = scmp.eq.s32.totalorder %s24, 1
      %p47 = por %p45, %p46
      %p49 = scmp.ne.s32.totalorder %s32, %s48
      %p50 = scmp.eq.s32.totalorder %s24, 0
      %p51 = por %p49, %p50
      %s52 = ssub.s32 %s18, %s25
      %p53 = scmp.eq.s32.totalorder %s52, 0
      %s55 = sadd.s32 %s54, 1
      %s56 = scalar_select %p53, %s54, %s55
      %p59 = pneg %p53
      %p60 = scmp.eq.s32.totalorder %s18, 1
      %p61 = por %p59, %p60
      %p62 = scmp.ne.s32.totalorder %s54, %s57
      %p63 = scmp.eq.s32.totalorder %s18, 0
      %p64 = por %p62, %p63
      %p65 = scmp.ne.s32.totalorder %s54, %s57
      %p66 = scmp.eq.s32.totalorder %s23, 1
      %p67 = por %p65, %p66
      %p68 = scmp.ne.s32.totalorder %s57, %s58
      %p69 = scmp.eq.s32.totalorder %s23, 0
      %p70 = por %p68, %p69
      %p71 = scmp.ne.s32.totalorder %s57, %s58
      %p72 = scmp.eq.s32.totalorder %s24, 1
      %p73 = por %p71, %p72
      %p75 = scmp.ne.s32.totalorder %s58, %s74
      %p76 = scmp.eq.s32.totalorder %s24, 0
      %p77 = por %p75, %p76
      %s79 = sadd.s32 %s78, 1
      %p82 = scmp.eq.s32.totalorder %s18, 1
      %p83 = scmp.ne.s32.totalorder %s78, %s80
      %p84 = scmp.eq.s32.totalorder %s18, 0
      %p85 = por %p83, %p84
      %p86 = scmp.ne.s32.totalorder %s78, %s80
      %p87 = scmp.eq.s32.totalorder %s23, 1
      %p88 = por %p86, %p87
      %p89 = scmp.ne.s32.totalorder %s80, %s81
      %p90 = scmp.eq.s32.totalorder %s23, 0
      %p91 = por %p89, %p90
      %p92 = scmp.ne.s32.totalorder %s80, %s81
      %p93 = scmp.eq.s32.totalorder %s24, 1
      %p94 = por %p92, %p93
      %p96 = scmp.ne.s32.totalorder %s81, %s95
      %p97 = scmp.eq.s32.totalorder %s24, 0
      %p98 = por %p96, %p97
      %s100 = sadd.s32 %s99, 1
      %p103 = scmp.eq.s32.totalorder %s18, 1
      %p104 = scmp.ne.s32.totalorder %s99, %s101
      %p105 = scmp.eq.s32.totalorder %s18, 0
      %p106 = por %p104, %p105
      %p107 = scmp.ne.s32.totalorder %s99, %s101
      %p108 = scmp.eq.s32.totalorder %s23, 1
      %p109 = por %p107, %p108
      %p110 = scmp.ne.s32.totalorder %s101, %s102
      %p111 = scmp.eq.s32.totalorder %s23, 0
      %p112 = por %p110, %p111
      %p113 = scmp.ne.s32.totalorder %s101, %s102
      %p114 = scmp.eq.s32.totalorder %s24, 1
      %p115 = por %p113, %p114
      %p117 = scmp.ne.s32.totalorder %s102, %s116
      %p118 = scmp.eq.s32.totalorder %s24, 0
      %p119 = por %p117, %p118
      %s121 = sadd.s32 %s120, 1
      %p124 = scmp.eq.s32.totalorder %s18, 1
      %p125 = scmp.ne.s32.totalorder %s120, %s122
      %p126 = scmp.eq.s32.totalorder %s18, 0
      %p127 = por %p125, %p126
      %p128 = scmp.ne.s32.totalorder %s120, %s122
      %p129 = scmp.eq.s32.totalorder %s23, 1
      %p130 = por %p128, %p129
      %p131 = scmp.ne.s32.totalorder %s122, %s123
      %p132 = scmp.eq.s32.totalorder %s23, 0
      %p133 = por %p131, %p132
      %p134 = scmp.ne.s32.totalorder %s122, %s123
      %p135 = scmp.eq.s32.totalorder %s24, 1
      %p136 = por %p134, %p135
      %p138 = scmp.ne.s32.totalorder %s123, %s137
      %p139 = scmp.eq.s32.totalorder %s24, 0
      %p140 = por %p138, %p139
      %s141 = ssub.s32 %s18, %s25
      %p142 = scmp.eq.s32.totalorder %s141, 0
      %s144 = sadd.s32 %s143, 1
      %s145 = scalar_select %p142, %s143, %s144
      %p148 = pneg %p142
      %p149 = scmp.eq.s32.totalorder %s18, 1
      %p150 = por %p148, %p149
      %p151 = scmp.ne.s32.totalorder %s143, %s146
      %p152 = scmp.eq.s32.totalorder %s18, 0
      %p153 = por %p151, %p152
      %p154 = scmp.ne.s32.totalorder %s143, %s146
      %p155 = scmp.eq.s32.totalorder %s23, 1
      %p156 = por %p154, %p155
      %p157 = scmp.ne.s32.totalorder %s146, %s147
      %p158 = scmp.eq.s32.totalorder %s23, 0
      %p159 = por %p157, %p158
      %p160 = scmp.ne.s32.totalorder %s146, %s147
      %p161 = scmp.eq.s32.totalorder %s24, 1
      %p162 = por %p160, %p161
      %p164 = scmp.ne.s32.totalorder %s147, %s163
      %p165 = scmp.eq.s32.totalorder %s24, 0
      %p166 = por %p164, %p165
      %p167 = scmp.le.s32.totalorder 1, %s18
      %p168 = scmp.lt.s32.totalorder %s18, 3
      %p169 = pnand %p167, %p168
      %p170 = pneg %p169
      // Predicated region
      $region9: #{tpu_custom_call.1} parent=5 // pred_check
        _
      $region10: #{tpu_custom_call.1} parent=5 // pred_check_branch
        %172 = sbr.rel (%p169) target = $region12
      $region11: #{tpu_custom_call.1} parent=5 // pred_region
        %s173 = ssub.s32 %s18, 1
        // Predicated region
        $region13: #{tpu_custom_call.1} parent=11 // pred_check
          %p174 = pneg %p91
        $region14: #{tpu_custom_call.1} parent=11 // pred_check_branch
          %176 = sbr.rel (%p174) target = $region16
        $region15: #{tpu_custom_call.1} parent=11 // pred_region
          %s178 = ssub.s32 256, 256
          %179 = vsyncadd [#allocation6], %s178
          %s180 = sshll.u32 [#allocation5], 4
          %s181 = int_to_ptr.vmem [resolvable:$true] %s180
          %186 = dma.hbm_to_vmem [thread:$0]  %s2, 256, %s181, [#allocation6], 128, 128, 8
        $region16: #{tpu_custom_call.1} parent=11 // pred_fallthru
          _
        // Predicated region
        $region17: #{tpu_custom_call.1} parent=11 // pred_check
          %p187 = pneg %p112
        $region18: #{tpu_custom_call.1} parent=11 // pred_check_branch
          %189 = sbr.rel (%p187) target = $region20
        $region19: #{tpu_custom_call.1} parent=11 // pred_region
          %s191 = ssub.s32 512, 512
          %192 = vsyncadd [#allocation6], %s191
          %s193 = sshll.u32 [#allocation7], 4
          %s194 = int_to_ptr.vmem [resolvable:$true] %s193
          %199 = dma.hbm_to_vmem [thread:$0]  %s3, 512, %s194, [#allocation6], 128, 128, 8
        $region20: #{tpu_custom_call.1} parent=11 // pred_fallthru
          _
        // Predicated region
        $region21: #{tpu_custom_call.1} parent=11 // pred_check
          %p200 = pneg %p133
        $region22: #{tpu_custom_call.1} parent=11 // pred_check_branch
          %202 = sbr.rel (%p200) target = $region24
        $region23: #{tpu_custom_call.1} parent=11 // pred_region
          _
        $region24: #{tpu_custom_call.1} parent=11 // pred_fallthru
          _
      $region12: #{tpu_custom_call.1} parent=5 // pred_fallthru
        _
      %p203 = scmp.lt.s32.totalorder %s18, 2
      // Predicated region
      $region25: #{tpu_custom_call.1} parent=5 // pred_check
        %p204 = pneg %p203
      $region26: #{tpu_custom_call.1} parent=5 // pred_check_branch
        %206 = sbr.rel (%p204) target = $region28
      $region27: #{tpu_custom_call.1} parent=5 // pred_region
        // Predicated region
        $region29: #{tpu_custom_call.1} parent=27 // pred_check
          %p207 = pneg %p38
        $region30: #{tpu_custom_call.1} parent=27 // pred_check_branch
          %209 = sbr.rel (%p207) target = $region32
        $region31: #{tpu_custom_call.1} parent=27 // pred_region
          %s210 = sand.u32 %s28, 1
          %s211 = scalar_lea.sflag [#allocation3], %s210
          %s212 = sand.u32 %s28, 1
          %s213 = smul.addr %s212, 8
          %s214 = scalar_lea.vmem [#allocation2], %s213
          %s216 = ssub.s32 128, 128
          %217 = vsyncadd %s211, %s216
          %s218 = smul.addr %s18, 128
          %s219 = scalar_lea.hbm %s0, %s218
          %s221 = sshll.u32 %s214, 4
          %s222 = int_to_ptr.vmem [resolvable:$true] %s221
          %224 = dma.hbm_to_vmem [thread:$0]  %s219, 128, %s222, %s211
        $region32: #{tpu_custom_call.1} parent=27 // pred_fallthru
          _
        // Predicated region
        $region33: #{tpu_custom_call.1} parent=27 // pred_check
          %p225 = pneg %p64
        $region34: #{tpu_custom_call.1} parent=27 // pred_check_branch
          %227 = sbr.rel (%p225) target = $region36
        $region35: #{tpu_custom_call.1} parent=27 // pred_region
          %p228 = scmp.lt.s32.totalorder %s18, 1
          %s229 = scalar_select %p228, %s18, 1
          %s230 = scalar_lea.vmem %s1, %s229
        $region36: #{tpu_custom_call.1} parent=27 // pred_fallthru
          _
      $region28: #{tpu_custom_call.1} parent=5 // pred_fallthru
        _
      %p231 = scmp.le.s32.totalorder 1, %s18
      %p232 = scmp.lt.s32.totalorder %s18, 3
      %p233 = pnand %p231, %p232
      %p234 = pneg %p233
      // Predicated region
      $region37: #{tpu_custom_call.1} parent=5 // pred_check
        _
      $region38: #{tpu_custom_call.1} parent=5 // pred_check_branch
        %236 = sbr.rel (%p233) target = $region40
      $region39: #{tpu_custom_call.1} parent=5 // pred_region
        %s237 = ssub.s32 %s18, 1
        %s238 = sand.u32 %s31, 1
        %s239 = scalar_lea.sflag [#allocation3], %s238
        %s240 = sand.u32 %s31, 1
        %s241 = smul.addr %s240, 8
        %s242 = scalar_lea.vmem [#allocation2], %s241
        // Predicated region
        $region41: #{tpu_custom_call.1} parent=39 // pred_check
          %p243 = pneg %p44
        $region42: #{tpu_custom_call.1} parent=39 // pred_check_branch
          %245 = sbr.rel (%p243) target = $region44
        $region43: #{tpu_custom_call.1} parent=39 // pred_region
          %246 = dma.done %s239, 128
        $region44: #{tpu_custom_call.1} parent=39 // pred_fallthru
          _
        // Predicated region
        $region45: #{tpu_custom_call.1} parent=39 // pred_check
          %p247 = pneg %p91
        $region46: #{tpu_custom_call.1} parent=39 // pred_check_branch
          %249 = sbr.rel (%p247) target = $region48
        $region47: #{tpu_custom_call.1} parent=39 // pred_region
          %250 = dma.done [#allocation6], 256
        $region48: #{tpu_custom_call.1} parent=39 // pred_fallthru
          _
        // Predicated region
        $region49: #{tpu_custom_call.1} parent=39 // pred_check
          %p251 = pneg %p112
        $region50: #{tpu_custom_call.1} parent=39 // pred_check_branch
          %253 = sbr.rel (%p251) target = $region52
        $region51: #{tpu_custom_call.1} parent=39 // pred_region
          %254 = dma.done [#allocation6], 512
        $region52: #{tpu_custom_call.1} parent=39 // pred_fallthru
          _
        %s255 = sand.u32 %s31, 1
        %s256 = scalar_lea.sflag [#allocation3], %s255
        %s257 = sand.u32 %s31, 1
        %s258 = smul.addr %s257, 8
        %s259 = scalar_lea.vmem [#allocation2], %s258
        %p260 = pneg %p44
        %p261 = pneg %p41
        %p262 = scmp.lt.s32.totalorder %s23, 1
        %s263 = scalar_select %p262, %s23, 1
        %s264 = scalar_lea.vmem %s1, %s263
        %p265 = pneg %p70
        %p266 = pneg %p67
        %p267 = pneg %p91
        %p268 = pneg %p88
        %p269 = pneg %p112
        %p270 = pneg %p109
        %p271 = pneg %p133
        %p272 = pneg %p130
        %p273 = pneg %p159
        %p274 = pneg %p156
        %s275 = sand.u32 %s146, 1
        %s276 = scalar_lea.sflag [#allocation4], %s275
        %s277 = sand.u32 %s146, 1
        %s278 = smul.addr %s277, 2
        %s279 = scalar_lea.vmem [#allocation8], %s278
        %p280 = scmp.lt.s32.totalorder %s23, 1
        %s281 = scalar_select %p280, %s23, 1
        %s282 = scalar_lea.vmem %s1, %s281
        %v283 = vld [vmem:[%s242] sm:$0xff]
        %v284 = vld [vmem:[#allocation5] sm:$0xff]
        %v285 = vld [vmem:[#allocation5 + $0x8] sm:$0xff]
        %vm286 = vcmask 130048
        %v288 = vsel %vm286, %v283, 0
        %290 = vmatprep.subr.mxu0 0.0
        %291 = vmatpush1.msra.mxu0 %v284
        %292 = vmatprep.subr.mxu0 0.0
        %293 = vmatpush1.msra.mxu0 %v285
        %294 = vmatprep.subr.mxu0 0.0
        %295 = vmatpush1.msra.mxu0 0.0
        %296 = vmatprep.subr.mxu0 0.0
        %297 = vmatpush1.msra.mxu0 0.0
        %298 = vmatprep.subr.mxu0 0.0
        %299 = vmatpush1.msra.mxu0 0.0
        %300 = vmatprep.subr.mxu0 0.0
        %301 = vmatpush1.msra.mxu0 0.0
        %302 = vmatprep.subr.mxu0 0.0
        %303 = vmatpush1.msra.mxu0 0.0
        %304 = vmatprep.subr.mxu0 0.0
        %305 = vmatpush1.msra.mxu0 0.0
        %306 = vmatprep.subr.mxu0 0.0
        %307 = vmatpush1.msra.mxu0 0.0
        %308 = vmatprep.subr.mxu0 0.0
        %309 = vmatpush1.msra.mxu0 0.0
        %310 = vmatprep.subr.mxu0 0.0
        %311 = vmatpush1.msra.mxu0 0.0
        %312 = vmatprep.subr.mxu0 0.0
        %313 = vmatpush1.msra.mxu0 0.0
        %314 = vmatprep.subr.mxu0 0.0
        %315 = vmatpush1.msra.mxu0 0.0
        %316 = vmatprep.subr.mxu0 0.0
        %317 = vmatpush1.msra.mxu0 0.0
        %318 = vmatprep.subr.mxu0 0.0
        %319 = vmatpush1.msra.mxu0 0.0
        %320 = vmatprep.subr.mxu0 0.0
        %321 = vmatpush1.msra.mxu0 0.0
        %322 = vmatprep.subr.mxu0 0.0
        %323 = vmatpush1.msra.mxu0 0.0
        %324 = vmatprep.subr.mxu0 0.0
        %325 = vmatpush1.msra.mxu0 0.0
        %326 = vmatprep.subr.mxu0 0.0
        %327 = vmatpush1.msra.mxu0 0.0
        %328 = vmatprep.subr.mxu0 0.0
        %329 = vmatpush1.msra.mxu0 0.0
        %330 = vmatprep.subr.mxu0 0.0
        %331 = vmatpush1.msra.mxu0 0.0
        %332 = vmatprep.subr.mxu0 0.0
        %333 = vmatpush1.msra.mxu0 0.0
        %334 = vmatprep.subr.mxu0 0.0
        %335 = vmatpush1.msra.mxu0 0.0
        %336 = vmatprep.subr.mxu0 0.0
        %337 = vmatpush1.msra.mxu0 0.0
        %338 = vmatprep.subr.mxu0 0.0
        %339 = vmatpush1.msra.mxu0 0.0
        %340 = vmatprep.subr.mxu0 0.0
        %341 = vmatpush1.msra.mxu0 0.0
        %342 = vmatprep.subr.mxu0 0.0
        %343 = vmatpush1.msra.mxu0 0.0
        %344 = vmatprep.subr.mxu0 0.0
        %345 = vmatpush1.msra.mxu0 0.0
        %346 = vmatprep.subr.mxu0 0.0
        %347 = vmatpush1.msra.mxu0 0.0
        %348 = vmatprep.subr.mxu0 0.0
        %349 = vmatpush1.msra.mxu0 0.0
        %350 = vmatprep.subr.mxu0 0.0
        %351 = vmatpush1.msra.mxu0 0.0
        %352 = vmatprep.subr.mxu0 0.0
        %353 = vmatpush1.msra.mxu0 0.0
        %354 = vmatprep.mubr.f32.mxu0 0.0
        %355 = vmatmul.mubr.f32.gmra.mrb[0].mxu0 %v288
        %v356 = vpop.f32.mrb[0].mxu0
        %v357 = vadd.f32 0.0, %v356
        %v358 = vpop.f32.mrb[0].mxu0
        %359 = vdwg.mxu0
        %v360 = vld [vmem:[#allocation7] sm:$0xff]
        %v361 = vld [vmem:[#allocation7 + $0x8] sm:$0xff]
        %v362 = vld [vmem:[#allocation7 + $0x10] sm:$0xff]
        %v363 = vld [vmem:[#allocation7 + $0x18] sm:$0xff]
        %v364 = vld [vmem:[%s4] sm:$0x1]
        %v365 = vld [vmem:[%s282] sm:$0x1]
        %vm366 = vcmask 261120
        %v368 = vsel %vm366, %v365, 0
        %370 = vmatprep.subr.mxu0 0.0
        %371 = vmatpush1.msra.mxu0 %v360
        %372 = vmatprep.subr.mxu0 0.0
        %373 = vmatpush1.msra.mxu0 %v361
        %374 = vmatprep.subr.mxu0 0.0
        %375 = vmatpush1.msra.mxu0 %v362
        %376 = vmatprep.subr.mxu0 0.0
        %377 = vmatpush1.msra.mxu0 %v363
        %378 = vmatprep.subr.mxu0 0.0
        %379 = vmatpush1.msra.mxu0 0.0
        %380 = vmatprep.subr.mxu0 0.0
        %381 = vmatpush1.msra.mxu0 0.0
        %382 = vmatprep.subr.mxu0 0.0
        %383 = vmatpush1.msra.mxu0 0.0
        %384 = vmatprep.subr.mxu0 0.0
        %385 = vmatpush1.msra.mxu0 0.0
        %386 = vmatprep.subr.mxu0 0.0
        %387 = vmatpush1.msra.mxu0 0.0
        %388 = vmatprep.subr.mxu0 0.0
        %389 = vmatpush1.msra.mxu0 0.0
        %390 = vmatprep.subr.mxu0 0.0
        %391 = vmatpush1.msra.mxu0 0.0
        %392 = vmatprep.subr.mxu0 0.0
        %393 = vmatpush1.msra.mxu0 0.0
        %394 = vmatprep.subr.mxu0 0.0
        %395 = vmatpush1.msra.mxu0 0.0
        %396 = vmatprep.subr.mxu0 0.0
        %397 = vmatpush1.msra.mxu0 0.0
        %398 = vmatprep.subr.mxu0 0.0
        %399 = vmatpush1.msra.mxu0 0.0
        %400 = vmatprep.subr.mxu0 0.0
        %401 = vmatpush1.msra.mxu0 0.0
        %402 = vmatprep.subr.mxu0 0.0
        %403 = vmatpush1.msra.mxu0 0.0
        %404 = vmatprep.subr.mxu0 0.0
        %405 = vmatpush1.msra.mxu0 0.0
        %406 = vmatprep.subr.mxu0 0.0
        %407 = vmatpush1.msra.mxu0 0.0
        %408 = vmatprep.subr.mxu0 0.0
        %409 = vmatpush1.msra.mxu0 0.0
        %410 = vmatprep.subr.mxu0 0.0
        %411 = vmatpush1.msra.mxu0 0.0
        %412 = vmatprep.subr.mxu0 0.0
        %413 = vmatpush1.msra.mxu0 0.0
        %414 = vmatprep.subr.mxu0 0.0
        %415 = vmatpush1.msra.mxu0 0.0
        %416 = vmatprep.subr.mxu0 0.0
        %417 = vmatpush1.msra.mxu0 0.0
        %418 = vmatprep.subr.mxu0 0.0
        %419 = vmatpush1.msra.mxu0 0.0
        %420 = vmatprep.subr.mxu0 0.0
        %421 = vmatpush1.msra.mxu0 0.0
        %422 = vmatprep.subr.mxu0 0.0
        %423 = vmatpush1.msra.mxu0 0.0
        %424 = vmatprep.subr.mxu0 0.0
        %425 = vmatpush1.msra.mxu0 0.0
        %426 = vmatprep.subr.mxu0 0.0
        %427 = vmatpush1.msra.mxu0 0.0
        %428 = vmatprep.subr.mxu0 0.0
        %429 = vmatpush1.msra.mxu0 0.0
        %430 = vmatprep.subr.mxu0 0.0
        %431 = vmatpush1.msra.mxu0 0.0
        %432 = vmatprep.subr.mxu0 0.0
        %433 = vmatpush1.msra.mxu0 0.0
        %434 = vmatprep.mubr.f32.mxu0 0.0
        %435 = vmatmul.mubr.f32.gmra.mrb[0].mxu0 %v368
        %v436 = vpop.f32.mrb[0].mxu0
        %v437 = vadd.f32 %v364, %v436
        %v438 = vpop.f32.mrb[0].mxu0
        %439 = vdwg.mxu0
        %v440 = vadd.f32 %v357, %v437
        %v441 = vxor.u32 %v440, 2147483648
        %v442 = vmul.f32 %v441, 1.442695
        %v443 = vpow.pop %v442
        %v444 = vadd.f32 %v443, 1.0
        %v445 = vrcp.pop %v444
        %v446 = vmul.f32 1.0, %v445
        %448 = vrot.lane.b32.xlu0 %v437, 64
        %v449 = vpop.permute.xlu0 %448
        %v451 = vmul.f32 %v446, %v449
        %453 = vrot.lane.b32.xlu0 %v451, 64
        %v454 = vpop.permute.xlu0 %453
        %v456 = vadd.f32 %v357, %v454
        %v457 = vtanh.pop %v456
        %v458 = vsub.f32 1.0, %v446
        %460 = vrot.lane.b32.xlu0 %v457, 96
        %v461 = vpop.permute.xlu0 %460
        %v463 = vmul.f32 %v458, %v461
        %v464 = vlaneseq
        %v465 = vshrl.u32 %v464, 7
        %v466 = vsub.s32 0, %v465
        %v467 = vrot.slane %v365, %v466
        %468 = vrot.lane.b32.xlu0 %v467, 32
        %v469 = vpop.permute.xlu0 %468
        %v471 = vmul.f32 %v446, %v469
        %v472 = vadd.f32 %v463, %v471
        %474 = vrot.lane.b32.xlu0 %v472, 96
        %v475 = vpop.permute.xlu0 %474
        %v476 = vsel %vm366, %v475, 0
        %478 = vmatprep.subr.mxu0 0.0
        %479 = vmatpush1.msra.mxu0 %v360
        %480 = vmatprep.subr.mxu0 0.0
        %481 = vmatpush1.msra.mxu0 %v361
        %482 = vmatprep.subr.mxu0 0.0
        %483 = vmatpush1.msra.mxu0 %v362
        %484 = vmatprep.subr.mxu0 0.0
        %485 = vmatpush1.msra.mxu0 %v363
        %486 = vmatprep.subr.mxu0 0.0
        %487 = vmatpush1.msra.mxu0 0.0
        %488 = vmatprep.subr.mxu0 0.0
        %489 = vmatpush1.msra.mxu0 0.0
        %490 = vmatprep.subr.mxu0 0.0
        %491 = vmatpush1.msra.mxu0 0.0
        %492 = vmatprep.subr.mxu0 0.0
        %493 = vmatpush1.msra.mxu0 0.0
        %494 = vmatprep.subr.mxu0 0.0
        %495 = vmatpush1.msra.mxu0 0.0
        %496 = vmatprep.subr.mxu0 0.0
        %497 = vmatpush1.msra.mxu0 0.0
        %498 = vmatprep.subr.mxu0 0.0
        %499 = vmatpush1.msra.mxu0 0.0
        %500 = vmatprep.subr.mxu0 0.0
        %501 = vmatpush1.msra.mxu0 0.0
        %502 = vmatprep.subr.mxu0 0.0
        %503 = vmatpush1.msra.mxu0 0.0
        %504 = vmatprep.subr.mxu0 0.0
        %505 = vmatpush1.msra.mxu0 0.0
        %506 = vmatprep.subr.mxu0 0.0
        %507 = vmatpush1.msra.mxu0 0.0
        %508 = vmatprep.subr.mxu0 0.0
        %509 = vmatpush1.msra.mxu0 0.0
        %510 = vmatprep.subr.mxu0 0.0
        %511 = vmatpush1.msra.mxu0 0.0
        %512 = vmatprep.subr.mxu0 0.0
        %513 = vmatpush1.msra.mxu0 0.0
        %514 = vmatprep.subr.mxu0 0.0
        %515 = vmatpush1.msra.mxu0 0.0
        %516 = vmatprep.subr.mxu0 0.0
        %517 = vmatpush1.msra.mxu0 0.0
        %518 = vmatprep.subr.mxu0 0.0
        %519 = vmatpush1.msra.mxu0 0.0
        %520 = vmatprep.subr.mxu0 0.0
        %521 = vmatpush1.msra.mxu0 0.0
        %522 = vmatprep.subr.mxu0 0.0
        %523 = vmatpush1.msra.mxu0 0.0
        %524 = vmatprep.subr.mxu0 0.0
        %525 = vmatpush1.msra.mxu0 0.0
        %526 = vmatprep.subr.mxu0 0.0
        %527 = vmatpush1.msra.mxu0 0.0
        %528 = vmatprep.subr.mxu0 0.0
        %529 = vmatpush1.msra.mxu0 0.0
        %530 = vmatprep.subr.mxu0 0.0
        %531 = vmatpush1.msra.mxu0 0.0
        %532 = vmatprep.subr.mxu0 0.0
        %533 = vmatpush1.msra.mxu0 0.0
        %534 = vmatprep.subr.mxu0 0.0
        %535 = vmatpush1.msra.mxu0 0.0
        %536 = vmatprep.subr.mxu0 0.0
        %537 = vmatpush1.msra.mxu0 0.0
        %538 = vmatprep.subr.mxu0 0.0
        %539 = vmatpush1.msra.mxu0 0.0
        %540 = vmatprep.subr.mxu0 0.0
        %541 = vmatpush1.msra.mxu0 0.0
        %542 = vmatprep.mubr.f32.mxu0 0.0
        %543 = vmatmul.mubr.f32.gmra.mrb[0].mxu0 %v476
        %v544 = vpop.f32.mrb[0].mxu0
        %v545 = vadd.f32 %v364, %v544
        %v546 = vpop.f32.mrb[0].mxu0
        %547 = vdwg.mxu0
        %v549 = vrot.slane %v545, 7
        %v551 = vadd.f32 %v357, %v549
        %v552 = vxor.u32 %v551, 2147483648
        %v553 = vmul.f32 %v552, 1.442695
        %v554 = vpow.pop %v553
        %v555 = vadd.f32 %v554, 1.0
        %v556 = vrcp.pop %v555
        %v557 = vmul.f32 1.0, %v556
        %558 = vrot.lane.b32.xlu0 %v549, 64
        %v559 = vpop.permute.xlu0 %558
        %v561 = vmul.f32 %v557, %v559
        %563 = vrot.lane.b32.xlu0 %v561, 64
        %v564 = vpop.permute.xlu0 %563
        %v566 = vadd.f32 %v357, %v564
        %v567 = vtanh.pop %v566
        %v568 = vsub.f32 1.0, %v557
        %570 = vrot.lane.b32.xlu0 %v567, 96
        %v571 = vpop.permute.xlu0 %570
        %v573 = vmul.f32 %v568, %v571
        %v574 = vrot.slane %v472, 7
        %v576 = vmul.f32 %v557, %v574
        %v577 = vadd.f32 %v573, %v576
        %v579 = vrot.slane %v577, 1
        %580 = vrot.lane.b32.xlu0 %v579, 96
        %v581 = vpop.permute.xlu0 %580
        %v582 = vsel %vm366, %v581, 0
        %584 = vmatprep.subr.mxu0 0.0
        %585 = vmatpush1.msra.mxu0 %v360
        %586 = vmatprep.subr.mxu0 0.0
        %587 = vmatpush1.msra.mxu0 %v361
        %588 = vmatprep.subr.mxu0 0.0
        %589 = vmatpush1.msra.mxu0 %v362
        %590 = vmatprep.subr.mxu0 0.0
        %591 = vmatpush1.msra.mxu0 %v363
        %592 = vmatprep.subr.mxu0 0.0
        %593 = vmatpush1.msra.mxu0 0.0
        %594 = vmatprep.subr.mxu0 0.0
        %595 = vmatpush1.msra.mxu0 0.0
        %596 = vmatprep.subr.mxu0 0.0
        %597 = vmatpush1.msra.mxu0 0.0
        %598 = vmatprep.subr.mxu0 0.0
        %599 = vmatpush1.msra.mxu0 0.0
        %600 = vmatprep.subr.mxu0 0.0
        %601 = vmatpush1.msra.mxu0 0.0
        %602 = vmatprep.subr.mxu0 0.0
        %603 = vmatpush1.msra.mxu0 0.0
        %604 = vmatprep.subr.mxu0 0.0
        %605 = vmatpush1.msra.mxu0 0.0
        %606 = vmatprep.subr.mxu0 0.0
        %607 = vmatpush1.msra.mxu0 0.0
        %608 = vmatprep.subr.mxu0 0.0
        %609 = vmatpush1.msra.mxu0 0.0
        %610 = vmatprep.subr.mxu0 0.0
        %611 = vmatpush1.msra.mxu0 0.0
        %612 = vmatprep.subr.mxu0 0.0
        %613 = vmatpush1.msra.mxu0 0.0
        %614 = vmatprep.subr.mxu0 0.0
        %615 = vmatpush1.msra.mxu0 0.0
        %616 = vmatprep.subr.mxu0 0.0
        %617 = vmatpush1.msra.mxu0 0.0
        %618 = vmatprep.subr.mxu0 0.0
        %619 = vmatpush1.msra.mxu0 0.0
        %620 = vmatprep.subr.mxu0 0.0
        %621 = vmatpush1.msra.mxu0 0.0
        %622 = vmatprep.subr.mxu0 0.0
        %623 = vmatpush1.msra.mxu0 0.0
        %624 = vmatprep.subr.mxu0 0.0
        %625 = vmatpush1.msra.mxu0 0.0
        %626 = vmatprep.subr.mxu0 0.0
        %627 = vmatpush1.msra.mxu0 0.0
        %628 = vmatprep.subr.mxu0 0.0
        %629 = vmatpush1.msra.mxu0 0.0
        %630 = vmatprep.subr.mxu0 0.0
        %631 = vmatpush1.msra.mxu0 0.0
        %632 = vmatprep.subr.mxu0 0.0
        %633 = vmatpush1.msra.mxu0 0.0
        %634 = vmatprep.subr.mxu0 0.0
        %635 = vmatpush1.msra.mxu0 0.0
        %636 = vmatprep.subr.mxu0 0.0
        %637 = vmatpush1.msra.mxu0 0.0
        %638 = vmatprep.subr.mxu0 0.0
        %639 = vmatpush1.msra.mxu0 0.0
        %640 = vmatprep.subr.mxu0 0.0
        %641 = vmatpush1.msra.mxu0 0.0
        %642 = vmatprep.subr.mxu0 0.0
        %643 = vmatpush1.msra.mxu0 0.0
        %644 = vmatprep.subr.mxu0 0.0
        %645 = vmatpush1.msra.mxu0 0.0
        %646 = vmatprep.subr.mxu0 0.0
        %647 = vmatpush1.msra.mxu0 0.0
        %648 = vmatprep.mubr.f32.mxu0 0.0
        %649 = vmatmul.mubr.f32.gmra.mrb[0].mxu0 %v582
        %v650 = vpop.f32.mrb[0].mxu0
        %v651 = vadd.f32 %v364, %v650
        %v652 = vpop.f32.mrb[0].mxu0
        %653 = vdwg.mxu0
        %v655 = vrot.slane %v651, 6
        %v657 = vadd.f32 %v357, %v655
        %v658 = vxor.u32 %v657, 2147483648
        %v659 = vmul.f32 %v658, 1.442695
        %v660 = vpow.pop %v659
        %v661 = vadd.f32 %v660, 1.0
        %v662 = vrcp.pop %v661
        %v663 = vmul.f32 1.0, %v662
        %664 = vrot.lane.b32.xlu0 %v655, 64
        %v665 = vpop.permute.xlu0 %664
        %v667 = vmul.f32 %v663, %v665
        %669 = vrot.lane.b32.xlu0 %v667, 64
        %v670 = vpop.permute.xlu0 %669
        %v672 = vadd.f32 %v357, %v670
        %v673 = vtanh.pop %v672
        %v674 = vsub.f32 1.0, %v663
        %676 = vrot.lane.b32.xlu0 %v673, 96
        %v677 = vpop.permute.xlu0 %676
        %v679 = vmul.f32 %v674, %v677
        %v680 = vrot.slane %v577, 7
        %v682 = vmul.f32 %v663, %v680
        %v683 = vadd.f32 %v679, %v682
        %v685 = vrot.slane %v683, 2
        %686 = vrot.lane.b32.xlu0 %v685, 96
        %v687 = vpop.permute.xlu0 %686
        %v688 = vsel %vm366, %v687, 0
        %690 = vmatprep.subr.mxu0 0.0
        %691 = vmatpush1.msra.mxu0 %v360
        %692 = vmatprep.subr.mxu0 0.0
        %693 = vmatpush1.msra.mxu0 %v361
        %694 = vmatprep.subr.mxu0 0.0
        %695 = vmatpush1.msra.mxu0 %v362
        %696 = vmatprep.subr.mxu0 0.0
        %697 = vmatpush1.msra.mxu0 %v363
        %698 = vmatprep.subr.mxu0 0.0
        %699 = vmatpush1.msra.mxu0 0.0
        %700 = vmatprep.subr.mxu0 0.0
        %701 = vmatpush1.msra.mxu0 0.0
        %702 = vmatprep.subr.mxu0 0.0
        %703 = vmatpush1.msra.mxu0 0.0
        %704 = vmatprep.subr.mxu0 0.0
        %705 = vmatpush1.msra.mxu0 0.0
        %706 = vmatprep.subr.mxu0 0.0
        %707 = vmatpush1.msra.mxu0 0.0
        %708 = vmatprep.subr.mxu0 0.0
        %709 = vmatpush1.msra.mxu0 0.0
        %710 = vmatprep.subr.mxu0 0.0
        %711 = vmatpush1.msra.mxu0 0.0
        %712 = vmatprep.subr.mxu0 0.0
        %713 = vmatpush1.msra.mxu0 0.0
        %714 = vmatprep.subr.mxu0 0.0
        %715 = vmatpush1.msra.mxu0 0.0
        %716 = vmatprep.subr.mxu0 0.0
        %717 = vmatpush1.msra.mxu0 0.0
        %718 = vmatprep.subr.mxu0 0.0
        %719 = vmatpush1.msra.mxu0 0.0
        %720 = vmatprep.subr.mxu0 0.0
        %721 = vmatpush1.msra.mxu0 0.0
        %722 = vmatprep.subr.mxu0 0.0
        %723 = vmatpush1.msra.mxu0 0.0
        %724 = vmatprep.subr.mxu0 0.0
        %725 = vmatpush1.msra.mxu0 0.0
        %726 = vmatprep.subr.mxu0 0.0
        %727 = vmatpush1.msra.mxu0 0.0
        %728 = vmatprep.subr.mxu0 0.0
        %729 = vmatpush1.msra.mxu0 0.0
        %730 = vmatprep.subr.mxu0 0.0
        %731 = vmatpush1.msra.mxu0 0.0
        %732 = vmatprep.subr.mxu0 0.0
        %733 = vmatpush1.msra.mxu0 0.0
        %734 = vmatprep.subr.mxu0 0.0
        %735 = vmatpush1.msra.mxu0 0.0
        %736 = vmatprep.subr.mxu0 0.0
        %737 = vmatpush1.msra.mxu0 0.0
        %738 = vmatprep.subr.mxu0 0.0
        %739 = vmatpush1.msra.mxu0 0.0
        %740 = vmatprep.subr.mxu0 0.0
        %741 = vmatpush1.msra.mxu0 0.0
        %742 = vmatprep.subr.mxu0 0.0
        %743 = vmatpush1.msra.mxu0 0.0
        %744 = vmatprep.subr.mxu0 0.0
        %745 = vmatpush1.msra.mxu0 0.0
        %746 = vmatprep.subr.mxu0 0.0
        %747 = vmatpush1.msra.mxu0 0.0
        %748 = vmatprep.subr.mxu0 0.0
        %749 = vmatpush1.msra.mxu0 0.0
        %750 = vmatprep.subr.mxu0 0.0
        %751 = vmatpush1.msra.mxu0 0.0
        %752 = vmatprep.subr.mxu0 0.0
        %753 = vmatpush1.msra.mxu0 0.0
        %754 = vmatprep.mubr.f32.mxu0 0.0
        %755 = vmatmul.mubr.f32.gmra.mrb[0].mxu0 %v688
        %v756 = vpop.f32.mrb[0].mxu0
        %v757 = vadd.f32 %v364, %v756
        %v758 = vpop.f32.mrb[0].mxu0
        %759 = vdwg.mxu0
        %v761 = vrot.slane %v757, 5
        %v763 = vadd.f32 %v357, %v761
        %v764 = vxor.u32 %v763, 2147483648
        %v765 = vmul.f32 %v764, 1.442695
        %v766 = vpow.pop %v765
        %v767 = vadd.f32 %v766, 1.0
        %v768 = vrcp.pop %v767
        %v769 = vmul.f32 1.0, %v768
        %770 = vrot.lane.b32.xlu0 %v761, 64
        %v771 = vpop.permute.xlu0 %770
        %v773 = vmul.f32 %v769, %v771
        %775 = vrot.lane.b32.xlu0 %v773, 64
        %v776 = vpop.permute.xlu0 %775
        %v778 = vadd.f32 %v357, %v776
        %v779 = vtanh.pop %v778
        %v780 = vsub.f32 1.0, %v769
        %782 = vrot.lane.b32.xlu0 %v779, 96
        %v783 = vpop.permute.xlu0 %782
        %v785 = vmul.f32 %v780, %v783
        %v786 = vrot.slane %v683, 7
        %v788 = vmul.f32 %v769, %v786
        %v789 = vadd.f32 %v785, %v788
        %v791 = vrot.slane %v789, 3
        %792 = vrot.lane.b32.xlu0 %v791, 96
        %v793 = vpop.permute.xlu0 %792
        %v794 = vsel %vm366, %v793, 0
        %796 = vmatprep.subr.mxu0 0.0
        %797 = vmatpush1.msra.mxu0 %v360
        %798 = vmatprep.subr.mxu0 0.0
        %799 = vmatpush1.msra.mxu0 %v361
        %800 = vmatprep.subr.mxu0 0.0
        %801 = vmatpush1.msra.mxu0 %v362
        %802 = vmatprep.subr.mxu0 0.0
        %803 = vmatpush1.msra.mxu0 %v363
        %804 = vmatprep.subr.mxu0 0.0
        %805 = vmatpush1.msra.mxu0 0.0
        %806 = vmatprep.subr.mxu0 0.0
        %807 = vmatpush1.msra.mxu0 0.0
        %808 = vmatprep.subr.mxu0 0.0
        %809 = vmatpush1.msra.mxu0 0.0
        %810 = vmatprep.subr.mxu0 0.0
        %811 = vmatpush1.msra.mxu0 0.0
        %812 = vmatprep.subr.mxu0 0.0
        %813 = vmatpush1.msra.mxu0 0.0
        %814 = vmatprep.subr.mxu0 0.0
        %815 = vmatpush1.msra.mxu0 0.0
        %816 = vmatprep.subr.mxu0 0.0
        %817 = vmatpush1.msra.mxu0 0.0
        %818 = vmatprep.subr.mxu0 0.0
        %819 = vmatpush1.msra.mxu0 0.0
        %820 = vmatprep.subr.mxu0 0.0
        %821 = vmatpush1.msra.mxu0 0.0
        %822 = vmatprep.subr.mxu0 0.0
        %823 = vmatpush1.msra.mxu0 0.0
        %824 = vmatprep.subr.mxu0 0.0
        %825 = vmatpush1.msra.mxu0 0.0
        %826 = vmatprep.subr.mxu0 0.0
        %827 = vmatpush1.msra.mxu0 0.0
        %828 = vmatprep.subr.mxu0 0.0
        %829 = vmatpush1.msra.mxu0 0.0
        %830 = vmatprep.subr.mxu0 0.0
        %831 = vmatpush1.msra.mxu0 0.0
        %832 = vmatprep.subr.mxu0 0.0
        %833 = vmatpush1.msra.mxu0 0.0
        %834 = vmatprep.subr.mxu0 0.0
        %835 = vmatpush1.msra.mxu0 0.0
        %836 = vmatprep.subr.mxu0 0.0
        %837 = vmatpush1.msra.mxu0 0.0
        %838 = vmatprep.subr.mxu0 0.0
        %839 = vmatpush1.msra.mxu0 0.0
        %840 = vmatprep.subr.mxu0 0.0
        %841 = vmatpush1.msra.mxu0 0.0
        %842 = vmatprep.subr.mxu0 0.0
        %843 = vmatpush1.msra.mxu0 0.0
        %844 = vmatprep.subr.mxu0 0.0
        %845 = vmatpush1.msra.mxu0 0.0
        %846 = vmatprep.subr.mxu0 0.0
        %847 = vmatpush1.msra.mxu0 0.0
        %848 = vmatprep.subr.mxu0 0.0
        %849 = vmatpush1.msra.mxu0 0.0
        %850 = vmatprep.subr.mxu0 0.0
        %851 = vmatpush1.msra.mxu0 0.0
        %852 = vmatprep.subr.mxu0 0.0
        %853 = vmatpush1.msra.mxu0 0.0
        %854 = vmatprep.subr.mxu0 0.0
        %855 = vmatpush1.msra.mxu0 0.0
        %856 = vmatprep.subr.mxu0 0.0
        %857 = vmatpush1.msra.mxu0 0.0
        %858 = vmatprep.subr.mxu0 0.0
        %859 = vmatpush1.msra.mxu0 0.0
        %860 = vmatprep.mubr.f32.mxu0 0.0
        %861 = vmatmul.mubr.f32.gmra.mrb[0].mxu0 %v794
        %v862 = vpop.f32.mrb[0].mxu0
        %v863 = vadd.f32 %v364, %v862
        %v864 = vpop.f32.mrb[0].mxu0
        %865 = vdwg.mxu0
        %v867 = vrot.slane %v863, 4
        %v869 = vadd.f32 %v357, %v867
        %v870 = vxor.u32 %v869, 2147483648
        %v871 = vmul.f32 %v870, 1.442695
        %v872 = vpow.pop %v871
        %v873 = vadd.f32 %v872, 1.0
        %v874 = vrcp.pop %v873
        %v875 = vmul.f32 1.0, %v874
        %876 = vrot.lane.b32.xlu0 %v867, 64
        %v877 = vpop.permute.xlu0 %876
        %v879 = vmul.f32 %v875, %v877
        %881 = vrot.lane.b32.xlu0 %v879, 64
        %v882 = vpop.permute.xlu0 %881
        %v884 = vadd.f32 %v357, %v882
        %v885 = vtanh.pop %v884
        %v886 = vsub.f32 1.0, %v875
        %888 = vrot.lane.b32.xlu0 %v885, 96
        %v889 = vpop.permute.xlu0 %888
        %v891 = vmul.f32 %v886, %v889
        %v892 = vrot.slane %v789, 7
        %v894 = vmul.f32 %v875, %v892
        %v895 = vadd.f32 %v891, %v894
        %v897 = vrot.slane %v895, 4
        %898 = vrot.lane.b32.xlu0 %v897, 96
        %v899 = vpop.permute.xlu0 %898
        %v900 = vsel %vm366, %v899, 0
        %902 = vmatprep.subr.mxu0 0.0
        %903 = vmatpush1.msra.mxu0 %v360
        %904 = vmatprep.subr.mxu0 0.0
        %905 = vmatpush1.msra.mxu0 %v361
        %906 = vmatprep.subr.mxu0 0.0
        %907 = vmatpush1.msra.mxu0 %v362
        %908 = vmatprep.subr.mxu0 0.0
        %909 = vmatpush1.msra.mxu0 %v363
        %910 = vmatprep.subr.mxu0 0.0
        %911 = vmatpush1.msra.mxu0 0.0
        %912 = vmatprep.subr.mxu0 0.0
        %913 = vmatpush1.msra.mxu0 0.0
        %914 = vmatprep.subr.mxu0 0.0
        %915 = vmatpush1.msra.mxu0 0.0
        %916 = vmatprep.subr.mxu0 0.0
        %917 = vmatpush1.msra.mxu0 0.0
        %918 = vmatprep.subr.mxu0 0.0
        %919 = vmatpush1.msra.mxu0 0.0
        %920 = vmatprep.subr.mxu0 0.0
        %921 = vmatpush1.msra.mxu0 0.0
        %922 = vmatprep.subr.mxu0 0.0
        %923 = vmatpush1.msra.mxu0 0.0
        %924 = vmatprep.subr.mxu0 0.0
        %925 = vmatpush1.msra.mxu0 0.0
        %926 = vmatprep.subr.mxu0 0.0
        %927 = vmatpush1.msra.mxu0 0.0
        %928 = vmatprep.subr.mxu0 0.0
        %929 = vmatpush1.msra.mxu0 0.0
        %930 = vmatprep.subr.mxu0 0.0
        %931 = vmatpush1.msra.mxu0 0.0
        %932 = vmatprep.subr.mxu0 0.0
        %933 = vmatpush1.msra.mxu0 0.0
        %934 = vmatprep.subr.mxu0 0.0
        %935 = vmatpush1.msra.mxu0 0.0
        %936 = vmatprep.subr.mxu0 0.0
        %937 = vmatpush1.msra.mxu0 0.0
        %938 = vmatprep.subr.mxu0 0.0
        %939 = vmatpush1.msra.mxu0 0.0
        %940 = vmatprep.subr.mxu0 0.0
        %941 = vmatpush1.msra.mxu0 0.0
        %942 = vmatprep.subr.mxu0 0.0
        %943 = vmatpush1.msra.mxu0 0.0
        %944 = vmatprep.subr.mxu0 0.0
        %945 = vmatpush1.msra.mxu0 0.0
        %946 = vmatprep.subr.mxu0 0.0
        %947 = vmatpush1.msra.mxu0 0.0
        %948 = vmatprep.subr.mxu0 0.0
        %949 = vmatpush1.msra.mxu0 0.0
        %950 = vmatprep.subr.mxu0 0.0
        %951 = vmatpush1.msra.mxu0 0.0
        %952 = vmatprep.subr.mxu0 0.0
        %953 = vmatpush1.msra.mxu0 0.0
        %954 = vmatprep.subr.mxu0 0.0
        %955 = vmatpush1.msra.mxu0 0.0
        %956 = vmatprep.subr.mxu0 0.0
        %957 = vmatpush1.msra.mxu0 0.0
        %958 = vmatprep.subr.mxu0 0.0
        %959 = vmatpush1.msra.mxu0 0.0
        %960 = vmatprep.subr.mxu0 0.0
        %961 = vmatpush1.msra.mxu0 0.0
        %962 = vmatprep.subr.mxu0 0.0
        %963 = vmatpush1.msra.mxu0 0.0
        %964 = vmatprep.subr.mxu0 0.0
        %965 = vmatpush1.msra.mxu0 0.0
        %966 = vmatprep.mubr.f32.mxu0 0.0
        %967 = vmatmul.mubr.f32.gmra.mrb[0].mxu0 %v900
        %v968 = vpop.f32.mrb[0].mxu0
        %v969 = vadd.f32 %v364, %v968
        %v970 = vpop.f32.mrb[0].mxu0
        %971 = vdwg.mxu0
        %v973 = vrot.slane %v969, 3
        %v975 = vadd.f32 %v357, %v973
        %v976 = vxor.u32 %v975, 2147483648
        %v977 = vmul.f32 %v976, 1.442695
        %v978 = vpow.pop %v977
        %v979 = vadd.f32 %v978, 1.0
        %v980 = vrcp.pop %v979
        %v981 = vmul.f32 1.0, %v980
        %982 = vrot.lane.b32.xlu0 %v973, 64
        %v983 = vpop.permute.xlu0 %982
        %v985 = vmul.f32 %v981, %v983
        %987 = vrot.lane.b32.xlu0 %v985, 64
        %v988 = vpop.permute.xlu0 %987
        %v990 = vadd.f32 %v357, %v988
        %v991 = vtanh.pop %v990
        %v992 = vsub.f32 1.0, %v981
        %994 = vrot.lane.b32.xlu0 %v991, 96
        %v995 = vpop.permute.xlu0 %994
        %v997 = vmul.f32 %v992, %v995
        %v998 = vrot.slane %v895, 7
        %v1000 = vmul.f32 %v981, %v998
        %v1001 = vadd.f32 %v997, %v1000
        %v1003 = vrot.slane %v1001, 5
        %1004 = vrot.lane.b32.xlu0 %v1003, 96
        %v1005 = vpop.permute.xlu0 %1004
        %v1006 = vsel %vm366, %v1005, 0
        %1008 = vmatprep.subr.mxu0 0.0
        %1009 = vmatpush1.msra.mxu0 %v360
        %1010 = vmatprep.subr.mxu0 0.0
        %1011 = vmatpush1.msra.mxu0 %v361
        %1012 = vmatprep.subr.mxu0 0.0
        %1013 = vmatpush1.msra.mxu0 %v362
        %1014 = vmatprep.subr.mxu0 0.0
        %1015 = vmatpush1.msra.mxu0 %v363
        %1016 = vmatprep.subr.mxu0 0.0
        %1017 = vmatpush1.msra.mxu0 0.0
        %1018 = vmatprep.subr.mxu0 0.0
        %1019 = vmatpush1.msra.mxu0 0.0
        %1020 = vmatprep.subr.mxu0 0.0
        %1021 = vmatpush1.msra.mxu0 0.0
        %1022 = vmatprep.subr.mxu0 0.0
        %1023 = vmatpush1.msra.mxu0 0.0
        %1024 = vmatprep.subr.mxu0 0.0
        %1025 = vmatpush1.msra.mxu0 0.0
        %1026 = vmatprep.subr.mxu0 0.0
        %1027 = vmatpush1.msra.mxu0 0.0
        %1028 = vmatprep.subr.mxu0 0.0
        %1029 = vmatpush1.msra.mxu0 0.0
        %1030 = vmatprep.subr.mxu0 0.0
        %1031 = vmatpush1.msra.mxu0 0.0
        %1032 = vmatprep.subr.mxu0 0.0
        %1033 = vmatpush1.msra.mxu0 0.0
        %1034 = vmatprep.subr.mxu0 0.0
        %1035 = vmatpush1.msra.mxu0 0.0
        %1036 = vmatprep.subr.mxu0 0.0
        %1037 = vmatpush1.msra.mxu0 0.0
        %1038 = vmatprep.subr.mxu0 0.0
        %1039 = vmatpush1.msra.mxu0 0.0
        %1040 = vmatprep.subr.mxu0 0.0
        %1041 = vmatpush1.msra.mxu0 0.0
        %1042 = vmatprep.subr.mxu0 0.0
        %1043 = vmatpush1.msra.mxu0 0.0
        %1044 = vmatprep.subr.mxu0 0.0
        %1045 = vmatpush1.msra.mxu0 0.0
        %1046 = vmatprep.subr.mxu0 0.0
        %1047 = vmatpush1.msra.mxu0 0.0
        %1048 = vmatprep.subr.mxu0 0.0
        %1049 = vmatpush1.msra.mxu0 0.0
        %1050 = vmatprep.subr.mxu0 0.0
        %1051 = vmatpush1.msra.mxu0 0.0
        %1052 = vmatprep.subr.mxu0 0.0
        %1053 = vmatpush1.msra.mxu0 0.0
        %1054 = vmatprep.subr.mxu0 0.0
        %1055 = vmatpush1.msra.mxu0 0.0
        %1056 = vmatprep.subr.mxu0 0.0
        %1057 = vmatpush1.msra.mxu0 0.0
        %1058 = vmatprep.subr.mxu0 0.0
        %1059 = vmatpush1.msra.mxu0 0.0
        %1060 = vmatprep.subr.mxu0 0.0
        %1061 = vmatpush1.msra.mxu0 0.0
        %1062 = vmatprep.subr.mxu0 0.0
        %1063 = vmatpush1.msra.mxu0 0.0
        %1064 = vmatprep.subr.mxu0 0.0
        %1065 = vmatpush1.msra.mxu0 0.0
        %1066 = vmatprep.subr.mxu0 0.0
        %1067 = vmatpush1.msra.mxu0 0.0
        %1068 = vmatprep.subr.mxu0 0.0
        %1069 = vmatpush1.msra.mxu0 0.0
        %1070 = vmatprep.subr.mxu0 0.0
        %1071 = vmatpush1.msra.mxu0 0.0
        %1072 = vmatprep.mubr.f32.mxu0 0.0
        %1073 = vmatmul.mubr.f32.gmra.mrb[0].mxu0 %v1006
        %v1074 = vpop.f32.mrb[0].mxu0
        %v1075 = vadd.f32 %v364, %v1074
        %v1076 = vpop.f32.mrb[0].mxu0
        %1077 = vdwg.mxu0
        %v1079 = vrot.slane %v1075, 2
        %v1081 = vadd.f32 %v357, %v1079
        %v1082 = vxor.u32 %v1081, 2147483648
        %v1083 = vmul.f32 %v1082, 1.442695
        %v1084 = vpow.pop %v1083
        %v1085 = vadd.f32 %v1084, 1.0
        %v1086 = vrcp.pop %v1085
        %v1087 = vmul.f32 1.0, %v1086
        %1088 = vrot.lane.b32.xlu0 %v1079, 64
        %v1089 = vpop.permute.xlu0 %1088
        %v1091 = vmul.f32 %v1087, %v1089
        %1093 = vrot.lane.b32.xlu0 %v1091, 64
        %v1094 = vpop.permute.xlu0 %1093
        %v1096 = vadd.f32 %v357, %v1094
        %v1097 = vtanh.pop %v1096
        %v1098 = vsub.f32 1.0, %v1087
        %1100 = vrot.lane.b32.xlu0 %v1097, 96
        %v1101 = vpop.permute.xlu0 %1100
        %v1103 = vmul.f32 %v1098, %v1101
        %v1104 = vrot.slane %v1001, 7
        %v1106 = vmul.f32 %v1087, %v1104
        %v1107 = vadd.f32 %v1103, %v1106
        %v1109 = vrot.slane %v1107, 6
        %1110 = vrot.lane.b32.xlu0 %v1109, 96
        %v1111 = vpop.permute.xlu0 %1110
        %v1112 = vsel %vm366, %v1111, 0
        %1114 = vmatprep.subr.mxu0 0.0
        %1115 = vmatpush1.msra.mxu0 %v360
        %1116 = vmatprep.subr.mxu0 0.0
        %1117 = vmatpush1.msra.mxu0 %v361
        %1118 = vmatprep.subr.mxu0 0.0
        %1119 = vmatpush1.msra.mxu0 %v362
        %1120 = vmatprep.subr.mxu0 0.0
        %1121 = vmatpush1.msra.mxu0 %v363
        %1122 = vmatprep.subr.mxu0 0.0
        %1123 = vmatpush1.msra.mxu0 0.0
        %1124 = vmatprep.subr.mxu0 0.0
        %1125 = vmatpush1.msra.mxu0 0.0
        %1126 = vmatprep.subr.mxu0 0.0
        %1127 = vmatpush1.msra.mxu0 0.0
        %1128 = vmatprep.subr.mxu0 0.0
        %1129 = vmatpush1.msra.mxu0 0.0
        %1130 = vmatprep.subr.mxu0 0.0
        %1131 = vmatpush1.msra.mxu0 0.0
        %1132 = vmatprep.subr.mxu0 0.0
        %1133 = vmatpush1.msra.mxu0 0.0
        %1134 = vmatprep.subr.mxu0 0.0
        %1135 = vmatpush1.msra.mxu0 0.0
        %1136 = vmatprep.subr.mxu0 0.0
        %1137 = vmatpush1.msra.mxu0 0.0
        %1138 = vmatprep.subr.mxu0 0.0
        %1139 = vmatpush1.msra.mxu0 0.0
        %1140 = vmatprep.subr.mxu0 0.0
        %1141 = vmatpush1.msra.mxu0 0.0
        %1142 = vmatprep.subr.mxu0 0.0
        %1143 = vmatpush1.msra.mxu0 0.0
        %1144 = vmatprep.subr.mxu0 0.0
        %1145 = vmatpush1.msra.mxu0 0.0
        %1146 = vmatprep.subr.mxu0 0.0
        %1147 = vmatpush1.msra.mxu0 0.0
        %1148 = vmatprep.subr.mxu0 0.0
        %1149 = vmatpush1.msra.mxu0 0.0
        %1150 = vmatprep.subr.mxu0 0.0
        %1151 = vmatpush1.msra.mxu0 0.0
        %1152 = vmatprep.subr.mxu0 0.0
        %1153 = vmatpush1.msra.mxu0 0.0
        %1154 = vmatprep.subr.mxu0 0.0
        %1155 = vmatpush1.msra.mxu0 0.0
        %1156 = vmatprep.subr.mxu0 0.0
        %1157 = vmatpush1.msra.mxu0 0.0
        %1158 = vmatprep.subr.mxu0 0.0
        %1159 = vmatpush1.msra.mxu0 0.0
        %1160 = vmatprep.subr.mxu0 0.0
        %1161 = vmatpush1.msra.mxu0 0.0
        %1162 = vmatprep.subr.mxu0 0.0
        %1163 = vmatpush1.msra.mxu0 0.0
        %1164 = vmatprep.subr.mxu0 0.0
        %1165 = vmatpush1.msra.mxu0 0.0
        %1166 = vmatprep.subr.mxu0 0.0
        %1167 = vmatpush1.msra.mxu0 0.0
        %1168 = vmatprep.subr.mxu0 0.0
        %1169 = vmatpush1.msra.mxu0 0.0
        %1170 = vmatprep.subr.mxu0 0.0
        %1171 = vmatpush1.msra.mxu0 0.0
        %1172 = vmatprep.subr.mxu0 0.0
        %1173 = vmatpush1.msra.mxu0 0.0
        %1174 = vmatprep.subr.mxu0 0.0
        %1175 = vmatpush1.msra.mxu0 0.0
        %1176 = vmatprep.subr.mxu0 0.0
        %1177 = vmatpush1.msra.mxu0 0.0
        %1178 = vmatprep.mubr.f32.mxu0 0.0
        %1179 = vmatmul.mubr.f32.gmra.mrb[0].mxu0 %v1112
        %v1180 = vpop.f32.mrb[0].mxu0
        %v1181 = vadd.f32 %v364, %v1180
        %v1182 = vpop.f32.mrb[0].mxu0
        %1183 = vdwg.mxu0
        %v1185 = vrot.slane %v1181, 1
        %v1187 = vadd.f32 %v357, %v1185
        %v1188 = vxor.u32 %v1187, 2147483648
        %v1189 = vmul.f32 %v1188, 1.442695
        %v1190 = vpow.pop %v1189
        %v1191 = vadd.f32 %v1190, 1.0
        %v1192 = vrcp.pop %v1191
        %v1193 = vmul.f32 1.0, %v1192
        %1194 = vrot.lane.b32.xlu0 %v1185, 64
        %v1195 = vpop.permute.xlu0 %1194
        %v1197 = vmul.f32 %v1193, %v1195
        %1199 = vrot.lane.b32.xlu0 %v1197, 64
        %v1200 = vpop.permute.xlu0 %1199
        %v1202 = vadd.f32 %v357, %v1200
        %v1203 = vtanh.pop %v1202
        %v1204 = vsub.f32 1.0, %v1193
        %1206 = vrot.lane.b32.xlu0 %v1203, 96
        %v1207 = vpop.permute.xlu0 %1206
        %v1209 = vmul.f32 %v1204, %v1207
        %v1210 = vrot.slane %v1107, 7
        %v1212 = vmul.f32 %v1193, %v1210
        %v1213 = vadd.f32 %v1209, %v1212
        %1216 = vrot.lane.b32.xlu0 %v685, 32
        %v1217 = vpop.permute.xlu0 %1216
        %1219 = vrot.lane.b32.xlu0 %v791, 64
        %v1220 = vpop.permute.xlu0 %1219
        %1224 = vrot.lane.b32.xlu0 %v1109, 32
        %v1225 = vpop.permute.xlu0 %1224
        %v1228 = vrot.slane %v1213, 7
        %1229 = vrot.lane.b32.xlu0 %v1228, 64
        %v1230 = vpop.permute.xlu0 %1229
        %v1232 = vsel %vm366, %v475, %v579
        %vm1233 = vcmask 523264
        %v1234 = vsel %vm1233, %v1232, %v1217
        %vm1235 = vcmask 785408
        %v1236 = vsel %vm1235, %v1234, %v1220
        %v1237 = vsel %vm366, %v899, %v1003
        %v1238 = vsel %vm1233, %v1237, %v1225
        %v1239 = vsel %vm1235, %v1238, %v1230
        %v1242 = vcombine.low %v1236, %v1239
        %v1244 = vunpack.c.l.s4 1966171168
        %v1245 = vunpack.c.0.s8 %v1244
        %v1246 = vlaneseq
        %v1247 = vshrl.u32 %v1246, 7
        %v1248 = vsub.s32 %v1245, %v1247
        %v1249 = vrot.slane %v1242, %v1248
        %v1251 = vunpack.c.l.s4 1966171168
        %v1252 = vunpack.c.0.s8 %v1251
        %v1253 = vlaneseq
        %v1254 = vshrl.u32 %v1253, 7
        %v1255 = vsub.s32 %v1252, %v1254
        %v1256 = vrot.slane %v1249, %v1255
        %v1258 = vlaneseq
        %vm1259 = vcmp.ge.s32.totalorder %v1258, 0
        %vm1260 = vcmp.lt.s32.totalorder %v1258, 256
        %vm1261 = vmand %vm1259, %vm1260
        %1262 = vst.msk [vmem:[%s279] sm:$0x3] %vm1261, %v1256
        %s1263 = sand.u32 %s146, 1
        %s1264 = scalar_lea.sflag [#allocation4], %s1263
        %s1265 = sand.u32 %s146, 1
        %s1266 = smul.addr %s1265, 2
        %s1267 = scalar_lea.vmem [#allocation8], %s1266
        // Predicated region
        $region53: #{tpu_custom_call.1} parent=39 // pred_check
          %p1268 = pneg %p156
        $region54: #{tpu_custom_call.1} parent=39 // pred_check_branch
          %1270 = sbr.rel (%p1268) target = $region56
        $region55: #{tpu_custom_call.1} parent=39 // pred_region
          %s1272 = ssub.s32 32, 32
          %1273 = vsyncadd %s1264, %s1272
          %s1274 = smul.addr %s23, 2
          %s1275 = smul.addr %s1274, 16
          %s1276 = scalar_lea.hbm %s5, %s1275
          %s1278 = sshll.u32 %s1267, 4
          %s1279 = int_to_ptr.vmem [resolvable:$true] %s1278
          %1281 = dma.vmem_to_hbm [thread:$0]  %s1279, 32, %s1276, %s1264
        $region56: #{tpu_custom_call.1} parent=39 // pred_fallthru
          _
      $region40: #{tpu_custom_call.1} parent=5 // pred_fallthru
        _
      %p1282 = scmp.le.s32.totalorder 2, %s18
      // Predicated region
      $region57: #{tpu_custom_call.1} parent=5 // pred_check
        %p1283 = pneg %p1282
      $region58: #{tpu_custom_call.1} parent=5 // pred_check_branch
        %1285 = sbr.rel (%p1283) target = $region60
      $region59: #{tpu_custom_call.1} parent=5 // pred_region
        %s1286 = ssub.s32 %s18, 2
        // Predicated region
        $region61: #{tpu_custom_call.1} parent=59 // pred_check
          %p1287 = pneg %p162
        $region62: #{tpu_custom_call.1} parent=59 // pred_check_branch
          %1289 = sbr.rel (%p1287) target = $region64
        $region63: #{tpu_custom_call.1} parent=59 // pred_region
          %s1290 = sand.u32 %s147, 1
          %s1291 = scalar_lea.sflag [#allocation4], %s1290
          %s1292 = sand.u32 %s147, 1
          %s1293 = smul.addr %s1292, 2
          %s1294 = scalar_lea.vmem [#allocation8], %s1293
          %1295 = dma.done %s1291, 32
        $region64: #{tpu_custom_call.1} parent=59 // pred_fallthru
          _
      $region60: #{tpu_custom_call.1} parent=5 // pred_fallthru
        _
    $region6: #{tpu_custom_call.1} parent=1 // loop_footer
      %s22 = sadd.s32 1, %s18
    $region7: #{tpu_custom_call.1} parent=1 // loop_footer_branch
      %17 = sbr.rel target = $region3
    $region8: #{tpu_custom_call.1} parent=1 // loop_exit
      _
    %1296 = vsyncpa [#allocation3], 1
    %s1297 = scalar_lea.sflag [#allocation3], 1
    %1298 = vsyncpa %s1297, 1
    %1299 = vsyncpa [#allocation6], 1
    %1300 = vsyncpa [#allocation4], 1
    %s1301 = scalar_lea.sflag [#allocation4], 1
    %1302 = vsyncpa %s1301, 1

</llo_original>
